<compile_context>
chip_gen: v7x
topology: tpu7x:2x2x1
jax: 0.10.0
libtpu: 0.0.40
codegen_flags: <defaults>
</compile_context>

<pallas_src>
import math

import jax
import jax.numpy as jnp
from jax import lax
from jax.experimental import pallas as pl
from jax.experimental.pallas import tpu as pltpu

_INV_SQRT2 = 1.0 / math.sqrt(2.0)
_SQRT_2_OVER_PI = math.sqrt(2.0 / math.pi)


# ----------------------------------------------------------------------------
# Kernels
# ----------------------------------------------------------------------------
def _gelu_exact_kernel(x_ref, o_ref):
    # Exact GELU (matches torch default approximate='none'):
    #   0.5 * x * (1 + erf(x / sqrt(2)))
    xf = x_ref[...].astype(jnp.float32)
    y = 0.5 * xf * (1.0 + lax.erf(xf * _INV_SQRT2))
    o_ref[...] = y.astype(o_ref.dtype)


def _gelu_tanh_kernel(x_ref, o_ref):
    # tanh-approx GELU: tanh lowers to the EUP (separate VLIW slot), relieving
    # the VALU on v6e/v7x.  Matches jax.nn.gelu(approximate=True) /
    # torch gelu(approximate='tanh'); NOT bit-identical to the exact erf form.
    xf = x_ref[...].astype(jnp.float32)
    inner = _SQRT_2_OVER_PI * (xf + 0.044715 * (xf * xf * xf))
    y = 0.5 * xf * (1.0 + jnp.tanh(inner))
    o_ref[...] = y.astype(o_ref.dtype)


# ----------------------------------------------------------------------------
# Device / tiling helpers (all static Python, no device round-trips)
# ----------------------------------------------------------------------------
def _device_kind() -> str:
    try:
        return jax.devices()[0].device_kind.lower()
    except Exception:
        return ""


def _is_v7x(kind: str) -> bool:
    # e.g. "tpu7x", "tpu v7x"
    return "7" in kind


def _default_use_tanh() -> bool:
    # v7x: exact-erf is VALU-bound -> default to the EUP/tanh kernel there.
    # v5e/v6e: exact-erf hides under the HBM roofline -> keep torch-exact.
    return _is_v7x(_device_kind())


def _two_tensorcores() -> bool:
    return _is_v7x(_device_kind())


def _sublane_multiple(dtype) -> int:
    # Native sublane tile height: 8 for 4-byte, 16 for 2-byte, 32 for 1-byte.
    itemsize = jnp.dtype(dtype).itemsize
    return max(8, 32 // max(1, itemsize))


def _pick_row_tile(rows: int, hidden: int, dtype, *, two_tc: bool) -> int:
    """Row tile: dtype-aware sublane multiple, ~1.5 MiB lane-dense blocks.

    On 2-TC parts, prefer an even number of >=4 grid steps (megacore sharding)
    but never shrink blocks below ~1 MiB chasing parity.
    """
    sub = _sublane_multiple(dtype)
    itemsize = jnp.dtype(dtype).itemsize
    if rows <= sub:
        return rows

    row_bytes = max(1, hidden * itemsize)
    target_bytes = 1536 * 1024  # ~1.5 MiB blocks (~85%+ of HBM roofline)
    rt = max(sub, ((target_bytes // row_bytes) // sub) * sub)
    rt = min(rt, (rows // sub) * sub)

    if two_tc:
        steps = pl.cdiv(rows, rt)
        steps = max(4, steps)
        if steps % 2:
            steps += 1
        rt_even = max(sub, pl.cdiv(pl.cdiv(rows, steps), sub) * sub)
        # Only accept the parity-friendly tile if it keeps blocks >= ~1 MiB
        # (or at least as large as the current choice).
        if rt_even * row_bytes >= min(1 << 20, rt * row_bytes):
            rt = rt_even

    return max(sub, rt)


# ----------------------------------------------------------------------------
# Public wrapper
# ----------------------------------------------------------------------------
def gelu_pallas(x: jax.Array, *, row_tile: int | None = None,
                approximate: bool | None = None,
                donate_input: bool = False) -> jax.Array:
    """GELU over an arbitrary-rank array; hot path is a Pallas TPU kernel.

    approximate:
      None  -> auto: tanh/EUP kernel on v7x, exact erf elsewhere.
      False -> exact erf GELU (bit-matches torch._C._nn.gelu default).
      True  -> tanh approximation (torch gelu(approximate='tanh')).
    """
    if approximate is None:
        approximate = _default_use_tanh()

    orig_shape = x.shape
    hidden = orig_shape[-1] if len(orig_shape) >= 1 else 1
    rows = math.prod(orig_shape[:-1]) if len(orig_shape) > 1 else 1
    x2d = x.reshape(rows, hidden)

    itemsize = jnp.dtype(x.dtype).itemsize
    two_tc = _two_tensorcores()
    rt = row_tile if row_tile is not None else _pick_row_tile(
        rows, hidden, x.dtype, two_tc=two_tc)
    grid = (pl.cdiv(rows, rt),)   # ragged last block is masked by Pallas

    n_elems = rows * hidden
    if approximate:
        # ~7 VALU ops/elem + one EUP tanh/elem.
        cost = pl.CostEstimate(flops=8 * n_elems,
                               transcendentals=n_elems,
                               bytes_accessed=2 * n_elems * itemsize)
    else:
        # erf lowers to a VALU polynomial (~25 ops/elem), no EUP op.
        cost = pl.CostEstimate(flops=28 * n_elems,
                               transcendentals=0,
                               bytes_accessed=2 * n_elems * itemsize)

    # Double-buffered in + out blocks; only raise the scoped-VMEM limit when we
    # would approach v5e's 16 MiB default.
    block_bytes = rt * hidden * itemsize
    vmem_need = 4 * block_bytes
    vmem_limit = None
    if vmem_need > 12 * (1 << 20):
        vmem_limit = min(vmem_need + (2 << 20), 48 * (1 << 20))

    kernel = _gelu_tanh_kernel if approximate else _gelu_exact_kernel

    out2d = pl.pallas_call(
        kernel,
        out_shape=jax.ShapeDtypeStruct((rows, hidden), x.dtype),
        grid_spec=pltpu.PrefetchScalarGridSpec(
            num_scalar_prefetch=0,
            grid=grid,
            in_specs=[pl.BlockSpec((rt, hidden), lambda i: (i, 0))],
            out_specs=pl.BlockSpec((rt, hidden), lambda i: (i, 0)),
        ),
        compiler_params=pltpu.CompilerParams(
            dimension_semantics=("parallel",),
            vmem_limit_bytes=vmem_limit,
        ),
        cost_estimate=cost,
        input_output_aliases=({0: 0} if donate_input else {}),
    )(x2d)

    return out2d.reshape(orig_shape)


# ----------------------------------------------------------------------------
# Self-test
# ----------------------------------------------------------------------------
if __name__ == "__main__":
    key = jax.random.PRNGKey(0)
    # Same shape as the PyTorch module's input: [1, 384, 3072]
    x191 = jax.random.normal(key, (1, 384, 3072), dtype=jnp.float32)

    # 1) Module semantics: exact erf GELU (torch._C._nn.gelu default).
    y_exact = gelu_pallas(x191, approximate=False)
    jax.block_until_ready(y_exact)
    ref_exact = jax.nn.gelu(x191, approximate=False)
    assert y_exact.shape == x191.shape and y_exact.dtype == x191.dtype
    assert jnp.max(jnp.abs(y_exact - ref_exact)) < 1e-5

    # 2) Auto (generation-aware) fast path: tanh/EUP kernel on v7x, exact
    #    elsewhere.  Validate against the matching JAX reference.
    use_tanh = _default_use_tanh()
    y_auto = gelu_pallas(x191)
    jax.block_until_ready(y_auto)
    ref_auto = jax.nn.gelu(x191, approximate=use_tanh)
    assert y_auto.shape == x191.shape and y_auto.dtype == x191.dtype
    assert jnp.max(jnp.abs(y_auto - ref_auto)) < 1e-4

    print("KERNEL_OK")
</pallas_src>

<mosaic_0001>
module attributes {stable_mosaic.version = 11 : i64} {
  func.func @_gelu_exact_kernel(%arg0: i32, %arg1: memref<128x3072xf32, #tpu.memory_space<vmem>>, %arg2: memref<128x3072xf32, #tpu.memory_space<vmem>>) attributes {dimension_semantics = [#tpu.dimension_semantics<parallel>], iteration_bounds = array<i64: 3>, scalar_prefetch = 0 : i64, scratch_operands = 0 : i64, tpu.core_type = #tpu.core_type<tc>, window_params = [{transform_indices = @transform_0, window_bounds = array<i64: 128, 3072>}, {transform_indices = @transform_1, window_bounds = array<i64: 128, 3072>}]} {
    %c0 = arith.constant 0 : index
    %c0_0 = arith.constant 0 : index
    %0 = vector.load %arg1[%c0, %c0_0] : memref<128x3072xf32, #tpu.memory_space<vmem>>, vector<128x3072xf32>
    %cst = arith.constant 5.000000e-01 : f32
    %1 = vector.broadcast %cst : f32 to vector<128x3072xf32>
    %2 = arith.mulf %1, %0 : vector<128x3072xf32>
    %cst_1 = arith.constant 0.707106769 : f32
    %3 = vector.broadcast %cst_1 : f32 to vector<128x3072xf32>
    %4 = arith.mulf %0, %3 : vector<128x3072xf32>
    %5 = math.erf %4 : vector<128x3072xf32>
    %cst_2 = arith.constant 1.000000e+00 : f32
    %6 = vector.broadcast %cst_2 : f32 to vector<128x3072xf32>
    %7 = arith.addf %6, %5 : vector<128x3072xf32>
    %8 = arith.mulf %2, %7 : vector<128x3072xf32>
    %c0_3 = arith.constant 0 : index
    %c0_4 = arith.constant 0 : index
    %9 = vector.load %arg2[%c0_3, %c0_4] : memref<128x3072xf32, #tpu.memory_space<vmem>>, vector<128x3072xf32>
    tpu.vector_store %arg2[%c0_3, %c0_4], %8 {strides = array<i32>} : memref<128x3072xf32, #tpu.memory_space<vmem>>, vector<128x3072xf32>,
    return
  }
  func.func @transform_0(%arg0: i32) -> (i32, i32) {
    %c0_i32 = arith.constant 0 : i32
    %c0_i32_0 = arith.constant 0 : i32
    return %arg0, %c0_i32 : i32, i32
  }
  func.func @transform_1(%arg0: i32) -> (i32, i32) {
    %c0_i32 = arith.constant 0 : i32
    %c0_i32_0 = arith.constant 0 : i32
    return %arg0, %c0_i32 : i32, i32
  }
}

</mosaic_0001>

<llo_original>
// kernel: tpu_custom_call.1
$region0: #{tpu_custom_call.1}
  #allocation0 [shape = 'u32[]', space=smem, size = 0x4, offset = 0x4, fixed_abs, tag = 'smem constant byte address 0x4 - core index']
  #allocation1 [shape = 'u32[144,128]{1,0:T(1,128)}', space=vmem, size = 0x12000, scoped, tag = 'internal scratch']
  %s0 = inlined_call_operand.hbm [shape: f32[384,3072], index: 0, kind: input, shape index: {}]
  %s1 = inlined_call_operand.hbm [shape: f32[384,3072], index: 1, kind: output, shape index: {}]
  %s2 = sld [smem:[#allocation0]]
  $region41: #{tpu_custom_call.1} parent=0
    _
  %s4 = ssub.s32 1, %s2
  %s5 = scalar_select 0, %s4, %s2
  $region1: #{tpu_custom_call.1} parent=0
    #allocation2 [shape = 'u8[3145728]{0}', space=vmem, size = 0x300000, scoped, tag = 'input window, operand 0']
    #allocation3 [shape = 's32[2]{0}', space=sflag, size = 0x8, scoped, tag = 'scoped memory for tpu_custom_call.1']
    #allocation4 [shape = 's32[2]{0}', space=sflag, size = 0x8, scoped, tag = 'scoped memory for tpu_custom_call.1']
    #allocation5 [shape = 'u8[3145728]{0}', space=vmem, size = 0x300000, scoped, tag = 'output window, operand 0']
    %6 = vsyncpa [#allocation3], 0
    %s7 = scalar_lea.sflag [#allocation3], 1
    %8 = vsyncpa %s7, 0
    %9 = vsyncpa [#allocation4], 0
    %s10 = scalar_lea.sflag [#allocation4], 1
    %11 = vsyncpa %s10, 0
    loop: start=0, step=1, limit=5
    $region2: #{tpu_custom_call.1} parent=1 // loop_pre_header
      _
    $region3: #{tpu_custom_call.1} parent=1 // loop_header
      %s13 = sphi 0, %s17
      %p14 = scmp.ge.s32.totalorder %s13, 5
      %s23 = sphi 0, %s25
      %s26 = sphi 0, %s23
      %s27 = sphi 0, %s26
      %s43 = sphi 0, %s27
      %s49 = sphi 0, %s51
      %s52 = sphi 0, %s49
      %s53 = sphi 0, %s52
      %s69 = sphi 0, %s53
    $region4: #{tpu_custom_call.1} parent=1 // loop_header_branch
      %16 = sbr.rel (%p14) target = $region8
    $region5: #{tpu_custom_call.1} parent=1 // loop_body
      %s18 = ssub.s32 %s13, 1
      %s19 = ssub.s32 %s13, 2
      %s20 = sadd.s32 %s13, 1
      %s21 = ssub.s32 %s13, %s20
      %p22 = scmp.eq.s32.totalorder %s21, 0
      %s24 = sadd.s32 %s23, 1
      %s25 = scalar_select %p22, %s23, %s24
      %p28 = pneg %p22
      %p29 = scmp.eq.s32.totalorder %s13, 2
      %p30 = por %p28, %p29
      %p31 = scmp.ne.s32.totalorder %s23, %s26
      %p32 = scmp.eq.s32.totalorder %s13, 0
      %p33 = por %p31, %p32
      %p34 = scmp.ne.s32.totalorder %s23, %s26
      %p35 = scmp.eq.s32.totalorder %s18, 2
      %p36 = por %p34, %p35
      %p37 = scmp.ne.s32.totalorder %s26, %s27
      %p38 = scmp.eq.s32.totalorder %s18, 0
      %p39 = por %p37, %p38
      %p40 = scmp.ne.s32.totalorder %s26, %s27
      %p41 = scmp.eq.s32.totalorder %s19, 2
      %p42 = por %p40, %p41
      %p44 = scmp.ne.s32.totalorder %s27, %s43
      %p45 = scmp.eq.s32.totalorder %s19, 0
      %p46 = por %p44, %p45
      %s47 = ssub.s32 %s13, %s20
      %p48 = scmp.eq.s32.totalorder %s47, 0
      %s50 = sadd.s32 %s49, 1
      %s51 = scalar_select %p48, %s49, %s50
      %p54 = pneg %p48
      %p55 = scmp.eq.s32.totalorder %s13, 2
      %p56 = por %p54, %p55
      %p57 = scmp.ne.s32.totalorder %s49, %s52
      %p58 = scmp.eq.s32.totalorder %s13, 0
      %p59 = por %p57, %p58
      %p60 = scmp.ne.s32.totalorder %s49, %s52
      %p61 = scmp.eq.s32.totalorder %s18, 2
      %p62 = por %p60, %p61
      %p63 = scmp.ne.s32.totalorder %s52, %s53
      %p64 = scmp.eq.s32.totalorder %s18, 0
      %p65 = por %p63, %p64
      %p66 = scmp.ne.s32.totalorder %s52, %s53
      %p67 = scmp.eq.s32.totalorder %s19, 2
      %p68 = por %p66, %p67
      %p70 = scmp.ne.s32.totalorder %s53, %s69
      %p71 = scmp.eq.s32.totalorder %s19, 0
      %p72 = por %p70, %p71
      %p73 = scmp.le.s32.totalorder 1, %s13
      %p74 = scmp.lt.s32.totalorder %s13, 4
      %p75 = pnand %p73, %p74
      %p76 = pneg %p75
      // Predicated region
      $region9: #{tpu_custom_call.1} parent=5 // pred_check
        _
      $region10: #{tpu_custom_call.1} parent=5 // pred_check_branch
        %78 = sbr.rel (%p75) target = $region12
      $region11: #{tpu_custom_call.1} parent=5 // pred_region
        %s79 = ssub.s32 %s13, 1
      $region12: #{tpu_custom_call.1} parent=5 // pred_fallthru
        _
      %p80 = scmp.lt.s32.totalorder %s13, 3
      // Predicated region
      $region13: #{tpu_custom_call.1} parent=5 // pred_check
        %p81 = pneg %p80
      $region14: #{tpu_custom_call.1} parent=5 // pred_check_branch
        %83 = sbr.rel (%p81) target = $region16
      $region15: #{tpu_custom_call.1} parent=5 // pred_region
        // Predicated region
        $region17: #{tpu_custom_call.1} parent=15 // pred_check
          %p84 = pneg %p33
        $region18: #{tpu_custom_call.1} parent=15 // pred_check_branch
          %86 = sbr.rel (%p84) target = $region20
        $region19: #{tpu_custom_call.1} parent=15 // pred_region
          %s87 = sand.u32 %s23, 1
          %s88 = scalar_lea.sflag [#allocation3], %s87
          %s89 = sand.u32 %s23, 1
          %s90 = smul.addr %s89, 3072
          %s91 = scalar_lea.vmem [#allocation2], %s90
          %s92 = smul.u32 16, %s13
          %s94 = ssub.s32 49152, 49152
          %95 = vsyncadd %s88, %s94
          %s96 = smul.addr %s92, 24
          %s97 = smul.addr %s96, 128
          %s98 = scalar_lea.hbm %s0, %s97
          %s99 = sshll.u32 %s91, 4
          %s100 = int_to_ptr.vmem [resolvable:$true] %s99
          %105 = dma.hbm_to_vmem [thread:$0]  %s98, 49152, %s100, %s88, 3072, 3072, 192
        $region20: #{tpu_custom_call.1} parent=15 // pred_fallthru
          _
      $region16: #{tpu_custom_call.1} parent=5 // pred_fallthru
        _
      %p106 = scmp.le.s32.totalorder 1, %s13
      %p107 = scmp.lt.s32.totalorder %s13, 4
      %p108 = pnand %p106, %p107
      %p109 = pneg %p108
      // Predicated region
      $region21: #{tpu_custom_call.1} parent=5 // pred_check
        _
      $region22: #{tpu_custom_call.1} parent=5 // pred_check_branch
        %111 = sbr.rel (%p108) target = $region24
      $region23: #{tpu_custom_call.1} parent=5 // pred_region
        %s112 = ssub.s32 %s13, 1
        %s113 = sand.u32 %s26, 1
        %s114 = scalar_lea.sflag [#allocation3], %s113
        %s115 = sand.u32 %s26, 1
        %s116 = smul.addr %s115, 3072
        %s117 = scalar_lea.vmem [#allocation2], %s116
        // Predicated region
        $region25: #{tpu_custom_call.1} parent=23 // pred_check
          %p118 = pneg %p39
        $region26: #{tpu_custom_call.1} parent=23 // pred_check_branch
          %120 = sbr.rel (%p118) target = $region28
        $region27: #{tpu_custom_call.1} parent=23 // pred_region
          %121 = dma.done %s114, 49152
        $region28: #{tpu_custom_call.1} parent=23 // pred_fallthru
          _
        %s122 = sand.u32 %s26, 1
        %s123 = scalar_lea.sflag [#allocation3], %s122
        %s124 = sand.u32 %s26, 1
        %s125 = smul.addr %s124, 3072
        %s126 = scalar_lea.vmem [#allocation2], %s125
        %p127 = pneg %p39
        %p128 = pneg %p36
        %p129 = pneg %p65
        %p130 = pneg %p62
        %s131 = sand.u32 %s52, 1
        %s132 = scalar_lea.sflag [#allocation4], %s131
        %s133 = sand.u32 %s52, 1
        %s134 = smul.addr %s133, 3072
        %s135 = scalar_lea.vmem [#allocation5], %s134
        %s136 = smul.u32 16, %s18
        %s137 = smul.u32 16, %s18
        %v138 = vld [vmem:[%s117] sm:$0xff]
        %v139 = vld [vmem:[%s117 + $0x8] sm:$0xff]
        %v140 = vld [vmem:[%s117 + $0x10] sm:$0xff]
        %v141 = vld [vmem:[%s117 + $0x18] sm:$0xff]
        %v142 = vld [vmem:[%s117 + $0x20] sm:$0xff]
        %v143 = vld [vmem:[%s117 + $0x28] sm:$0xff]
        %v144 = vld [vmem:[%s117 + $0x30] sm:$0xff]
        %v145 = vld [vmem:[%s117 + $0x38] sm:$0xff]
        %v146 = vld [vmem:[%s117 + $0x40] sm:$0xff]
        %v147 = vld [vmem:[%s117 + $0x48] sm:$0xff]
        %v148 = vld [vmem:[%s117 + $0x50] sm:$0xff]
        %v149 = vld [vmem:[%s117 + $0x58] sm:$0xff]
        %v150 = vld [vmem:[%s117 + $0x60] sm:$0xff]
        %v151 = vld [vmem:[%s117 + $0x68] sm:$0xff]
        %v152 = vld [vmem:[%s117 + $0x70] sm:$0xff]
        %v153 = vld [vmem:[%s117 + $0x78] sm:$0xff]
        %v154 = vld [vmem:[%s117 + $0x80] sm:$0xff]
        %v155 = vld [vmem:[%s117 + $0x88] sm:$0xff]
        %v156 = vld [vmem:[%s117 + $0x90] sm:$0xff]
        %v157 = vld [vmem:[%s117 + $0x98] sm:$0xff]
        %v158 = vld [vmem:[%s117 + $0xa0] sm:$0xff]
        %v159 = vld [vmem:[%s117 + $0xa8] sm:$0xff]
        %v160 = vld [vmem:[%s117 + $0xb0] sm:$0xff]
        %v161 = vld [vmem:[%s117 + $0xb8] sm:$0xff]
        %v162 = vld [vmem:[%s117 + $0xc0] sm:$0xff]
        %v163 = vld [vmem:[%s117 + $0xc8] sm:$0xff]
        %v164 = vld [vmem:[%s117 + $0xd0] sm:$0xff]
        %v165 = vld [vmem:[%s117 + $0xd8] sm:$0xff]
        %v166 = vld [vmem:[%s117 + $0xe0] sm:$0xff]
        %v167 = vld [vmem:[%s117 + $0xe8] sm:$0xff]
        %v168 = vld [vmem:[%s117 + $0xf0] sm:$0xff]
        %v169 = vld [vmem:[%s117 + $0xf8] sm:$0xff]
        %v170 = vld [vmem:[%s117 + $0x100] sm:$0xff]
        %v171 = vld [vmem:[%s117 + $0x108] sm:$0xff]
        %v172 = vld [vmem:[%s117 + $0x110] sm:$0xff]
        %v173 = vld [vmem:[%s117 + $0x118] sm:$0xff]
        %v174 = vld [vmem:[%s117 + $0x120] sm:$0xff]
        %v175 = vld [vmem:[%s117 + $0x128] sm:$0xff]
        %v176 = vld [vmem:[%s117 + $0x130] sm:$0xff]
        %v177 = vld [vmem:[%s117 + $0x138] sm:$0xff]
        %v178 = vld [vmem:[%s117 + $0x140] sm:$0xff]
        %v179 = vld [vmem:[%s117 + $0x148] sm:$0xff]
        %v180 = vld [vmem:[%s117 + $0x150] sm:$0xff]
        %v181 = vld [vmem:[%s117 + $0x158] sm:$0xff]
        %v182 = vld [vmem:[%s117 + $0x160] sm:$0xff]
        %v183 = vld [vmem:[%s117 + $0x168] sm:$0xff]
        %v184 = vld [vmem:[%s117 + $0x170] sm:$0xff]
        %v185 = vld [vmem:[%s117 + $0x178] sm:$0xff]
        %v186 = vld [vmem:[%s117 + $0x180] sm:$0xff]
        %v187 = vld [vmem:[%s117 + $0x188] sm:$0xff]
        %v188 = vld [vmem:[%s117 + $0x190] sm:$0xff]
        %v189 = vld [vmem:[%s117 + $0x198] sm:$0xff]
        %v190 = vld [vmem:[%s117 + $0x1a0] sm:$0xff]
        %v191 = vld [vmem:[%s117 + $0x1a8] sm:$0xff]
        %v192 = vld [vmem:[%s117 + $0x1b0] sm:$0xff]
        %v193 = vld [vmem:[%s117 + $0x1b8] sm:$0xff]
        %v194 = vld [vmem:[%s117 + $0x1c0] sm:$0xff]
        %v195 = vld [vmem:[%s117 + $0x1c8] sm:$0xff]
        %v196 = vld [vmem:[%s117 + $0x1d0] sm:$0xff]
        %v197 = vld [vmem:[%s117 + $0x1d8] sm:$0xff]
        %v198 = vld [vmem:[%s117 + $0x1e0] sm:$0xff]
        %v199 = vld [vmem:[%s117 + $0x1e8] sm:$0xff]
        %v200 = vld [vmem:[%s117 + $0x1f0] sm:$0xff]
        %v201 = vld [vmem:[%s117 + $0x1f8] sm:$0xff]
        %v202 = vld [vmem:[%s117 + $0x200] sm:$0xff]
        %v203 = vld [vmem:[%s117 + $0x208] sm:$0xff]
        %v204 = vld [vmem:[%s117 + $0x210] sm:$0xff]
        %v205 = vld [vmem:[%s117 + $0x218] sm:$0xff]
        %v206 = vld [vmem:[%s117 + $0x220] sm:$0xff]
        %v207 = vld [vmem:[%s117 + $0x228] sm:$0xff]
        %v208 = vld [vmem:[%s117 + $0x230] sm:$0xff]
        %v209 = vld [vmem:[%s117 + $0x238] sm:$0xff]
        %v210 = vld [vmem:[%s117 + $0x240] sm:$0xff]
        %v211 = vld [vmem:[%s117 + $0x248] sm:$0xff]
        %v212 = vld [vmem:[%s117 + $0x250] sm:$0xff]
        %v213 = vld [vmem:[%s117 + $0x258] sm:$0xff]
        %v214 = vld [vmem:[%s117 + $0x260] sm:$0xff]
        %v215 = vld [vmem:[%s117 + $0x268] sm:$0xff]
        %v216 = vld [vmem:[%s117 + $0x270] sm:$0xff]
        %v217 = vld [vmem:[%s117 + $0x278] sm:$0xff]
        %v218 = vld [vmem:[%s117 + $0x280] sm:$0xff]
        %v219 = vld [vmem:[%s117 + $0x288] sm:$0xff]
        %v220 = vld [vmem:[%s117 + $0x290] sm:$0xff]
        %v221 = vld [vmem:[%s117 + $0x298] sm:$0xff]
        %v222 = vld [vmem:[%s117 + $0x2a0] sm:$0xff]
        %v223 = vld [vmem:[%s117 + $0x2a8] sm:$0xff]
        %v224 = vld [vmem:[%s117 + $0x2b0] sm:$0xff]
        %v225 = vld [vmem:[%s117 + $0x2b8] sm:$0xff]
        %v226 = vld [vmem:[%s117 + $0x2c0] sm:$0xff]
        %v227 = vld [vmem:[%s117 + $0x2c8] sm:$0xff]
        %v228 = vld [vmem:[%s117 + $0x2d0] sm:$0xff]
        %v229 = vld [vmem:[%s117 + $0x2d8] sm:$0xff]
        %v230 = vld [vmem:[%s117 + $0x2e0] sm:$0xff]
        %v231 = vld [vmem:[%s117 + $0x2e8] sm:$0xff]
        %v232 = vld [vmem:[%s117 + $0x2f0] sm:$0xff]
        %v233 = vld [vmem:[%s117 + $0x2f8] sm:$0xff]
        %v234 = vld [vmem:[%s117 + $0x300] sm:$0xff]
        %v235 = vld [vmem:[%s117 + $0x308] sm:$0xff]
        %v236 = vld [vmem:[%s117 + $0x310] sm:$0xff]
        %v237 = vld [vmem:[%s117 + $0x318] sm:$0xff]
        %v238 = vld [vmem:[%s117 + $0x320] sm:$0xff]
        %v239 = vld [vmem:[%s117 + $0x328] sm:$0xff]
        %v240 = vld [vmem:[%s117 + $0x330] sm:$0xff]
        %v241 = vld [vmem:[%s117 + $0x338] sm:$0xff]
        %v242 = vld [vmem:[%s117 + $0x340] sm:$0xff]
        %v243 = vld [vmem:[%s117 + $0x348] sm:$0xff]
        %v244 = vld [vmem:[%s117 + $0x350] sm:$0xff]
        %v245 = vld [vmem:[%s117 + $0x358] sm:$0xff]
        %v246 = vld [vmem:[%s117 + $0x360] sm:$0xff]
        %v247 = vld [vmem:[%s117 + $0x368] sm:$0xff]
        %v248 = vld [vmem:[%s117 + $0x370] sm:$0xff]
        %v249 = vld [vmem:[%s117 + $0x378] sm:$0xff]
        %v250 = vld [vmem:[%s117 + $0x380] sm:$0xff]
        %v251 = vld [vmem:[%s117 + $0x388] sm:$0xff]
        %v252 = vld [vmem:[%s117 + $0x390] sm:$0xff]
        %v253 = vld [vmem:[%s117 + $0x398] sm:$0xff]
        %v254 = vld [vmem:[%s117 + $0x3a0] sm:$0xff]
        %v255 = vld [vmem:[%s117 + $0x3a8] sm:$0xff]
        %v256 = vld [vmem:[%s117 + $0x3b0] sm:$0xff]
        %v257 = vld [vmem:[%s117 + $0x3b8] sm:$0xff]
        %v258 = vld [vmem:[%s117 + $0x3c0] sm:$0xff]
        %v259 = vld [vmem:[%s117 + $0x3c8] sm:$0xff]
        %v260 = vld [vmem:[%s117 + $0x3d0] sm:$0xff]
        %v261 = vld [vmem:[%s117 + $0x3d8] sm:$0xff]
        %v262 = vld [vmem:[%s117 + $0x3e0] sm:$0xff]
        %v263 = vld [vmem:[%s117 + $0x3e8] sm:$0xff]
        %v264 = vld [vmem:[%s117 + $0x3f0] sm:$0xff]
        %v265 = vld [vmem:[%s117 + $0x3f8] sm:$0xff]
        %v266 = vld [vmem:[%s117 + $0x400] sm:$0xff]
        %v267 = vld [vmem:[%s117 + $0x408] sm:$0xff]
        %v268 = vld [vmem:[%s117 + $0x410] sm:$0xff]
        %v269 = vld [vmem:[%s117 + $0x418] sm:$0xff]
        %v270 = vld [vmem:[%s117 + $0x420] sm:$0xff]
        %v271 = vld [vmem:[%s117 + $0x428] sm:$0xff]
        %v272 = vld [vmem:[%s117 + $0x430] sm:$0xff]
        %v273 = vld [vmem:[%s117 + $0x438] sm:$0xff]
        %v274 = vld [vmem:[%s117 + $0x440] sm:$0xff]
        %v275 = vld [vmem:[%s117 + $0x448] sm:$0xff]
        %v276 = vld [vmem:[%s117 + $0x450] sm:$0xff]
        %v277 = vld [vmem:[%s117 + $0x458] sm:$0xff]
        %v278 = vld [vmem:[%s117 + $0x460] sm:$0xff]
        %v279 = vld [vmem:[%s117 + $0x468] sm:$0xff]
        %v280 = vld [vmem:[%s117 + $0x470] sm:$0xff]
        %v281 = vld [vmem:[%s117 + $0x478] sm:$0xff]
        %v282 = vld [vmem:[%s117 + $0x480] sm:$0xff]
        %v283 = vld [vmem:[%s117 + $0x488] sm:$0xff]
        %v284 = vld [vmem:[%s117 + $0x490] sm:$0xff]
        %v285 = vld [vmem:[%s117 + $0x498] sm:$0xff]
        %v286 = vld [vmem:[%s117 + $0x4a0] sm:$0xff]
        %v287 = vld [vmem:[%s117 + $0x4a8] sm:$0xff]
        %v288 = vld [vmem:[%s117 + $0x4b0] sm:$0xff]
        %v289 = vld [vmem:[%s117 + $0x4b8] sm:$0xff]
        %v290 = vld [vmem:[%s117 + $0x4c0] sm:$0xff]
        %v291 = vld [vmem:[%s117 + $0x4c8] sm:$0xff]
        %v292 = vld [vmem:[%s117 + $0x4d0] sm:$0xff]
        %v293 = vld [vmem:[%s117 + $0x4d8] sm:$0xff]
        %v294 = vld [vmem:[%s117 + $0x4e0] sm:$0xff]
        %v295 = vld [vmem:[%s117 + $0x4e8] sm:$0xff]
        %v296 = vld [vmem:[%s117 + $0x4f0] sm:$0xff]
        %v297 = vld [vmem:[%s117 + $0x4f8] sm:$0xff]
        %v298 = vld [vmem:[%s117 + $0x500] sm:$0xff]
        %v299 = vld [vmem:[%s117 + $0x508] sm:$0xff]
        %v300 = vld [vmem:[%s117 + $0x510] sm:$0xff]
        %v301 = vld [vmem:[%s117 + $0x518] sm:$0xff]
        %v302 = vld [vmem:[%s117 + $0x520] sm:$0xff]
        %v303 = vld [vmem:[%s117 + $0x528] sm:$0xff]
        %v304 = vld [vmem:[%s117 + $0x530] sm:$0xff]
        %v305 = vld [vmem:[%s117 + $0x538] sm:$0xff]
        %v306 = vld [vmem:[%s117 + $0x540] sm:$0xff]
        %v307 = vld [vmem:[%s117 + $0x548] sm:$0xff]
        %v308 = vld [vmem:[%s117 + $0x550] sm:$0xff]
        %v309 = vld [vmem:[%s117 + $0x558] sm:$0xff]
        %v310 = vld [vmem:[%s117 + $0x560] sm:$0xff]
        %v311 = vld [vmem:[%s117 + $0x568] sm:$0xff]
        %v312 = vld [vmem:[%s117 + $0x570] sm:$0xff]
        %v313 = vld [vmem:[%s117 + $0x578] sm:$0xff]
        %v314 = vld [vmem:[%s117 + $0x580] sm:$0xff]
        %v315 = vld [vmem:[%s117 + $0x588] sm:$0xff]
        %v316 = vld [vmem:[%s117 + $0x590] sm:$0xff]
        %v317 = vld [vmem:[%s117 + $0x598] sm:$0xff]
        %v318 = vld [vmem:[%s117 + $0x5a0] sm:$0xff]
        %v319 = vld [vmem:[%s117 + $0x5a8] sm:$0xff]
        %v320 = vld [vmem:[%s117 + $0x5b0] sm:$0xff]
        %v321 = vld [vmem:[%s117 + $0x5b8] sm:$0xff]
        %v322 = vld [vmem:[%s117 + $0x5c0] sm:$0xff]
        %v323 = vld [vmem:[%s117 + $0x5c8] sm:$0xff]
        %v324 = vld [vmem:[%s117 + $0x5d0] sm:$0xff]
        %v325 = vld [vmem:[%s117 + $0x5d8] sm:$0xff]
        %v326 = vld [vmem:[%s117 + $0x5e0] sm:$0xff]
        %v327 = vld [vmem:[%s117 + $0x5e8] sm:$0xff]
        %v328 = vld [vmem:[%s117 + $0x5f0] sm:$0xff]
        %v329 = vld [vmem:[%s117 + $0x5f8] sm:$0xff]
        %v330 = vld [vmem:[%s117 + $0x600] sm:$0xff]
        %v331 = vld [vmem:[%s117 + $0x608] sm:$0xff]
        %v332 = vld [vmem:[%s117 + $0x610] sm:$0xff]
        %v333 = vld [vmem:[%s117 + $0x618] sm:$0xff]
        %v334 = vld [vmem:[%s117 + $0x620] sm:$0xff]
        %v335 = vld [vmem:[%s117 + $0x628] sm:$0xff]
        %v336 = vld [vmem:[%s117 + $0x630] sm:$0xff]
        %v337 = vld [vmem:[%s117 + $0x638] sm:$0xff]
        %v338 = vld [vmem:[%s117 + $0x640] sm:$0xff]
        %v339 = vld [vmem:[%s117 + $0x648] sm:$0xff]
        %v340 = vld [vmem:[%s117 + $0x650] sm:$0xff]
        %v341 = vld [vmem:[%s117 + $0x658] sm:$0xff]
        %v342 = vld [vmem:[%s117 + $0x660] sm:$0xff]
        %v343 = vld [vmem:[%s117 + $0x668] sm:$0xff]
        %v344 = vld [vmem:[%s117 + $0x670] sm:$0xff]
        %v345 = vld [vmem:[%s117 + $0x678] sm:$0xff]
        %v346 = vld [vmem:[%s117 + $0x680] sm:$0xff]
        %v347 = vld [vmem:[%s117 + $0x688] sm:$0xff]
        %v348 = vld [vmem:[%s117 + $0x690] sm:$0xff]
        %v349 = vld [vmem:[%s117 + $0x698] sm:$0xff]
        %v350 = vld [vmem:[%s117 + $0x6a0] sm:$0xff]
        %v351 = vld [vmem:[%s117 + $0x6a8] sm:$0xff]
        %v352 = vld [vmem:[%s117 + $0x6b0] sm:$0xff]
        %v353 = vld [vmem:[%s117 + $0x6b8] sm:$0xff]
        %v354 = vld [vmem:[%s117 + $0x6c0] sm:$0xff]
        %v355 = vld [vmem:[%s117 + $0x6c8] sm:$0xff]
        %v356 = vld [vmem:[%s117 + $0x6d0] sm:$0xff]
        %v357 = vld [vmem:[%s117 + $0x6d8] sm:$0xff]
        %v358 = vld [vmem:[%s117 + $0x6e0] sm:$0xff]
        %v359 = vld [vmem:[%s117 + $0x6e8] sm:$0xff]
        %v360 = vld [vmem:[%s117 + $0x6f0] sm:$0xff]
        %v361 = vld [vmem:[%s117 + $0x6f8] sm:$0xff]
        %v362 = vld [vmem:[%s117 + $0x700] sm:$0xff]
        %v363 = vld [vmem:[%s117 + $0x708] sm:$0xff]
        %v364 = vld [vmem:[%s117 + $0x710] sm:$0xff]
        %v365 = vld [vmem:[%s117 + $0x718] sm:$0xff]
        %v366 = vld [vmem:[%s117 + $0x720] sm:$0xff]
        %v367 = vld [vmem:[%s117 + $0x728] sm:$0xff]
        %v368 = vld [vmem:[%s117 + $0x730] sm:$0xff]
        %v369 = vld [vmem:[%s117 + $0x738] sm:$0xff]
        %v370 = vld [vmem:[%s117 + $0x740] sm:$0xff]
        %v371 = vld [vmem:[%s117 + $0x748] sm:$0xff]
        %v372 = vld [vmem:[%s117 + $0x750] sm:$0xff]
        %v373 = vld [vmem:[%s117 + $0x758] sm:$0xff]
        %v374 = vld [vmem:[%s117 + $0x760] sm:$0xff]
        %v375 = vld [vmem:[%s117 + $0x768] sm:$0xff]
        %v376 = vld [vmem:[%s117 + $0x770] sm:$0xff]
        %v377 = vld [vmem:[%s117 + $0x778] sm:$0xff]
        %v378 = vld [vmem:[%s117 + $0x780] sm:$0xff]
        %v379 = vld [vmem:[%s117 + $0x788] sm:$0xff]
        %v380 = vld [vmem:[%s117 + $0x790] sm:$0xff]
        %v381 = vld [vmem:[%s117 + $0x798] sm:$0xff]
        %v382 = vld [vmem:[%s117 + $0x7a0] sm:$0xff]
        %v383 = vld [vmem:[%s117 + $0x7a8] sm:$0xff]
        %v384 = vld [vmem:[%s117 + $0x7b0] sm:$0xff]
        %v385 = vld [vmem:[%s117 + $0x7b8] sm:$0xff]
        %v386 = vld [vmem:[%s117 + $0x7c0] sm:$0xff]
        %v387 = vld [vmem:[%s117 + $0x7c8] sm:$0xff]
        %v388 = vld [vmem:[%s117 + $0x7d0] sm:$0xff]
        %v389 = vld [vmem:[%s117 + $0x7d8] sm:$0xff]
        %v390 = vld [vmem:[%s117 + $0x7e0] sm:$0xff]
        %v391 = vld [vmem:[%s117 + $0x7e8] sm:$0xff]
        %v392 = vld [vmem:[%s117 + $0x7f0] sm:$0xff]
        %v393 = vld [vmem:[%s117 + $0x7f8] sm:$0xff]
        %v394 = vld [vmem:[%s117 + $0x800] sm:$0xff]
        %v395 = vld [vmem:[%s117 + $0x808] sm:$0xff]
        %v396 = vld [vmem:[%s117 + $0x810] sm:$0xff]
        %v397 = vld [vmem:[%s117 + $0x818] sm:$0xff]
        %v398 = vld [vmem:[%s117 + $0x820] sm:$0xff]
        %v399 = vld [vmem:[%s117 + $0x828] sm:$0xff]
        %v400 = vld [vmem:[%s117 + $0x830] sm:$0xff]
        %v401 = vld [vmem:[%s117 + $0x838] sm:$0xff]
        %v402 = vld [vmem:[%s117 + $0x840] sm:$0xff]
        %v403 = vld [vmem:[%s117 + $0x848] sm:$0xff]
        %v404 = vld [vmem:[%s117 + $0x850] sm:$0xff]
        %v405 = vld [vmem:[%s117 + $0x858] sm:$0xff]
        %v406 = vld [vmem:[%s117 + $0x860] sm:$0xff]
        %v407 = vld [vmem:[%s117 + $0x868] sm:$0xff]
        %v408 = vld [vmem:[%s117 + $0x870] sm:$0xff]
        %v409 = vld [vmem:[%s117 + $0x878] sm:$0xff]
        %v410 = vld [vmem:[%s117 + $0x880] sm:$0xff]
        %v411 = vld [vmem:[%s117 + $0x888] sm:$0xff]
        %v412 = vld [vmem:[%s117 + $0x890] sm:$0xff]
        %v413 = vld [vmem:[%s117 + $0x898] sm:$0xff]
        %v414 = vld [vmem:[%s117 + $0x8a0] sm:$0xff]
        %v415 = vld [vmem:[%s117 + $0x8a8] sm:$0xff]
        %v416 = vld [vmem:[%s117 + $0x8b0] sm:$0xff]
        %v417 = vld [vmem:[%s117 + $0x8b8] sm:$0xff]
        %v418 = vld [vmem:[%s117 + $0x8c0] sm:$0xff]
        %v419 = vld [vmem:[%s117 + $0x8c8] sm:$0xff]
        %v420 = vld [vmem:[%s117 + $0x8d0] sm:$0xff]
        %v421 = vld [vmem:[%s117 + $0x8d8] sm:$0xff]
        %v422 = vld [vmem:[%s117 + $0x8e0] sm:$0xff]
        %v423 = vld [vmem:[%s117 + $0x8e8] sm:$0xff]
        %v424 = vld [vmem:[%s117 + $0x8f0] sm:$0xff]
        %v425 = vld [vmem:[%s117 + $0x8f8] sm:$0xff]
        %v426 = vld [vmem:[%s117 + $0x900] sm:$0xff]
        %v427 = vld [vmem:[%s117 + $0x908] sm:$0xff]
        %v428 = vld [vmem:[%s117 + $0x910] sm:$0xff]
        %v429 = vld [vmem:[%s117 + $0x918] sm:$0xff]
        %v430 = vld [vmem:[%s117 + $0x920] sm:$0xff]
        %v431 = vld [vmem:[%s117 + $0x928] sm:$0xff]
        %v432 = vld [vmem:[%s117 + $0x930] sm:$0xff]
        %v433 = vld [vmem:[%s117 + $0x938] sm:$0xff]
        %v434 = vld [vmem:[%s117 + $0x940] sm:$0xff]
        %v435 = vld [vmem:[%s117 + $0x948] sm:$0xff]
        %v436 = vld [vmem:[%s117 + $0x950] sm:$0xff]
        %v437 = vld [vmem:[%s117 + $0x958] sm:$0xff]
        %v438 = vld [vmem:[%s117 + $0x960] sm:$0xff]
        %v439 = vld [vmem:[%s117 + $0x968] sm:$0xff]
        %v440 = vld [vmem:[%s117 + $0x970] sm:$0xff]
        %v441 = vld [vmem:[%s117 + $0x978] sm:$0xff]
        %v442 = vld [vmem:[%s117 + $0x980] sm:$0xff]
        %v443 = vld [vmem:[%s117 + $0x988] sm:$0xff]
        %v444 = vld [vmem:[%s117 + $0x990] sm:$0xff]
        %v445 = vld [vmem:[%s117 + $0x998] sm:$0xff]
        %v446 = vld [vmem:[%s117 + $0x9a0] sm:$0xff]
        %v447 = vld [vmem:[%s117 + $0x9a8] sm:$0xff]
        %v448 = vld [vmem:[%s117 + $0x9b0] sm:$0xff]
        %v449 = vld [vmem:[%s117 + $0x9b8] sm:$0xff]
        %v450 = vld [vmem:[%s117 + $0x9c0] sm:$0xff]
        %v451 = vld [vmem:[%s117 + $0x9c8] sm:$0xff]
        %v452 = vld [vmem:[%s117 + $0x9d0] sm:$0xff]
        %v453 = vld [vmem:[%s117 + $0x9d8] sm:$0xff]
        %v454 = vld [vmem:[%s117 + $0x9e0] sm:$0xff]
        %v455 = vld [vmem:[%s117 + $0x9e8] sm:$0xff]
        %v456 = vld [vmem:[%s117 + $0x9f0] sm:$0xff]
        %v457 = vld [vmem:[%s117 + $0x9f8] sm:$0xff]
        %v458 = vld [vmem:[%s117 + $0xa00] sm:$0xff]
        %v459 = vld [vmem:[%s117 + $0xa08] sm:$0xff]
        %v460 = vld [vmem:[%s117 + $0xa10] sm:$0xff]
        %v461 = vld [vmem:[%s117 + $0xa18] sm:$0xff]
        %v462 = vld [vmem:[%s117 + $0xa20] sm:$0xff]
        %v463 = vld [vmem:[%s117 + $0xa28] sm:$0xff]
        %v464 = vld [vmem:[%s117 + $0xa30] sm:$0xff]
        %v465 = vld [vmem:[%s117 + $0xa38] sm:$0xff]
        %v466 = vld [vmem:[%s117 + $0xa40] sm:$0xff]
        %v467 = vld [vmem:[%s117 + $0xa48] sm:$0xff]
        %v468 = vld [vmem:[%s117 + $0xa50] sm:$0xff]
        %v469 = vld [vmem:[%s117 + $0xa58] sm:$0xff]
        %v470 = vld [vmem:[%s117 + $0xa60] sm:$0xff]
        %v471 = vld [vmem:[%s117 + $0xa68] sm:$0xff]
        %v472 = vld [vmem:[%s117 + $0xa70] sm:$0xff]
        %v473 = vld [vmem:[%s117 + $0xa78] sm:$0xff]
        %v474 = vld [vmem:[%s117 + $0xa80] sm:$0xff]
        %v475 = vld [vmem:[%s117 + $0xa88] sm:$0xff]
        %v476 = vld [vmem:[%s117 + $0xa90] sm:$0xff]
        %v477 = vld [vmem:[%s117 + $0xa98] sm:$0xff]
        %v478 = vld [vmem:[%s117 + $0xaa0] sm:$0xff]
        %v479 = vld [vmem:[%s117 + $0xaa8] sm:$0xff]
        %v480 = vld [vmem:[%s117 + $0xab0] sm:$0xff]
        %v481 = vld [vmem:[%s117 + $0xab8] sm:$0xff]
        %v482 = vld [vmem:[%s117 + $0xac0] sm:$0xff]
        %v483 = vld [vmem:[%s117 + $0xac8] sm:$0xff]
        %v484 = vld [vmem:[%s117 + $0xad0] sm:$0xff]
        %v485 = vld [vmem:[%s117 + $0xad8] sm:$0xff]
        %v486 = vld [vmem:[%s117 + $0xae0] sm:$0xff]
        %v487 = vld [vmem:[%s117 + $0xae8] sm:$0xff]
        %v488 = vld [vmem:[%s117 + $0xaf0] sm:$0xff]
        %v489 = vld [vmem:[%s117 + $0xaf8] sm:$0xff]
        %v490 = vld [vmem:[%s117 + $0xb00] sm:$0xff]
        %v491 = vld [vmem:[%s117 + $0xb08] sm:$0xff]
        %v492 = vld [vmem:[%s117 + $0xb10] sm:$0xff]
        %v493 = vld [vmem:[%s117 + $0xb18] sm:$0xff]
        %v494 = vld [vmem:[%s117 + $0xb20] sm:$0xff]
        %v495 = vld [vmem:[%s117 + $0xb28] sm:$0xff]
        %v496 = vld [vmem:[%s117 + $0xb30] sm:$0xff]
        %v497 = vld [vmem:[%s117 + $0xb38] sm:$0xff]
        %v498 = vld [vmem:[%s117 + $0xb40] sm:$0xff]
        %v499 = vld [vmem:[%s117 + $0xb48] sm:$0xff]
        %v500 = vld [vmem:[%s117 + $0xb50] sm:$0xff]
        %v501 = vld [vmem:[%s117 + $0xb58] sm:$0xff]
        %v502 = vld [vmem:[%s117 + $0xb60] sm:$0xff]
        %v503 = vld [vmem:[%s117 + $0xb68] sm:$0xff]
        %v504 = vld [vmem:[%s117 + $0xb70] sm:$0xff]
        %v505 = vld [vmem:[%s117 + $0xb78] sm:$0xff]
        %v506 = vld [vmem:[%s117 + $0xb80] sm:$0xff]
        %v507 = vld [vmem:[%s117 + $0xb88] sm:$0xff]
        %v508 = vld [vmem:[%s117 + $0xb90] sm:$0xff]
        %v509 = vld [vmem:[%s117 + $0xb98] sm:$0xff]
        %v510 = vld [vmem:[%s117 + $0xba0] sm:$0xff]
        %v511 = vld [vmem:[%s117 + $0xba8] sm:$0xff]
        %v512 = vld [vmem:[%s117 + $0xbb0] sm:$0xff]
        %v513 = vld [vmem:[%s117 + $0xbb8] sm:$0xff]
        %v514 = vld [vmem:[%s117 + $0xbc0] sm:$0xff]
        %v515 = vld [vmem:[%s117 + $0xbc8] sm:$0xff]
        %v516 = vld [vmem:[%s117 + $0xbd0] sm:$0xff]
        %v517 = vld [vmem:[%s117 + $0xbd8] sm:$0xff]
        %v518 = vld [vmem:[%s117 + $0xbe0] sm:$0xff]
        %v519 = vld [vmem:[%s117 + $0xbe8] sm:$0xff]
        %v520 = vld [vmem:[%s117 + $0xbf0] sm:$0xff]
        %v521 = vld [vmem:[%s117 + $0xbf8] sm:$0xff]
        %v522 = vmul.f32 %v138, 0.5
        %v523 = vmul.f32 %v139, 0.5
        %v524 = vmul.f32 %v140, 0.5
        %v525 = vmul.f32 %v141, 0.5
        %v526 = vmul.f32 %v142, 0.5
        %v527 = vmul.f32 %v143, 0.5
        %v528 = vmul.f32 %v144, 0.5
        %v529 = vmul.f32 %v145, 0.5
        %v530 = vmul.f32 %v146, 0.5
        %v531 = vmul.f32 %v147, 0.5
        %v532 = vmul.f32 %v148, 0.5
        %v533 = vmul.f32 %v149, 0.5
        %v534 = vmul.f32 %v150, 0.5
        %v535 = vmul.f32 %v151, 0.5
        %v536 = vmul.f32 %v152, 0.5
        %v537 = vmul.f32 %v153, 0.5
        %v538 = vmul.f32 %v154, 0.5
        %v539 = vmul.f32 %v155, 0.5
        %v540 = vmul.f32 %v156, 0.5
        %v541 = vmul.f32 %v157, 0.5
        %v542 = vmul.f32 %v158, 0.5
        %v543 = vmul.f32 %v159, 0.5
        %v544 = vmul.f32 %v160, 0.5
        %v545 = vmul.f32 %v161, 0.5
        %v546 = vmul.f32 %v162, 0.5
        %v547 = vmul.f32 %v163, 0.5
        %v548 = vmul.f32 %v164, 0.5
        %v549 = vmul.f32 %v165, 0.5
        %v550 = vmul.f32 %v166, 0.5
        %v551 = vmul.f32 %v167, 0.5
        %v552 = vmul.f32 %v168, 0.5
        %v553 = vmul.f32 %v169, 0.5
        %v554 = vmul.f32 %v170, 0.5
        %v555 = vmul.f32 %v171, 0.5
        %v556 = vmul.f32 %v172, 0.5
        %v557 = vmul.f32 %v173, 0.5
        %v558 = vmul.f32 %v174, 0.5
        %v559 = vmul.f32 %v175, 0.5
        %v560 = vmul.f32 %v176, 0.5
        %v561 = vmul.f32 %v177, 0.5
        %v562 = vmul.f32 %v178, 0.5
        %v563 = vmul.f32 %v179, 0.5
        %v564 = vmul.f32 %v180, 0.5
        %v565 = vmul.f32 %v181, 0.5
        %v566 = vmul.f32 %v182, 0.5
        %v567 = vmul.f32 %v183, 0.5
        %v568 = vmul.f32 %v184, 0.5
        %v569 = vmul.f32 %v185, 0.5
        %v570 = vmul.f32 %v186, 0.5
        %v571 = vmul.f32 %v187, 0.5
        %v572 = vmul.f32 %v188, 0.5
        %v573 = vmul.f32 %v189, 0.5
        %v574 = vmul.f32 %v190, 0.5
        %v575 = vmul.f32 %v191, 0.5
        %v576 = vmul.f32 %v192, 0.5
        %v577 = vmul.f32 %v193, 0.5
        %v578 = vmul.f32 %v194, 0.5
        %v579 = vmul.f32 %v195, 0.5
        %v580 = vmul.f32 %v196, 0.5
        %v581 = vmul.f32 %v197, 0.5
        %v582 = vmul.f32 %v198, 0.5
        %v583 = vmul.f32 %v199, 0.5
        %v584 = vmul.f32 %v200, 0.5
        %v585 = vmul.f32 %v201, 0.5
        %v586 = vmul.f32 %v202, 0.5
        %v587 = vmul.f32 %v203, 0.5
        %v588 = vmul.f32 %v204, 0.5
        %v589 = vmul.f32 %v205, 0.5
        %v590 = vmul.f32 %v206, 0.5
        %v591 = vmul.f32 %v207, 0.5
        %v592 = vmul.f32 %v208, 0.5
        %v593 = vmul.f32 %v209, 0.5
        %v594 = vmul.f32 %v210, 0.5
        %v595 = vmul.f32 %v211, 0.5
        %v596 = vmul.f32 %v212, 0.5
        %v597 = vmul.f32 %v213, 0.5
        %v598 = vmul.f32 %v214, 0.5
        %v599 = vmul.f32 %v215, 0.5
        %v600 = vmul.f32 %v216, 0.5
        %v601 = vmul.f32 %v217, 0.5
        %v602 = vmul.f32 %v218, 0.5
        %v603 = vmul.f32 %v219, 0.5
        %v604 = vmul.f32 %v220, 0.5
        %v605 = vmul.f32 %v221, 0.5
        %v606 = vmul.f32 %v222, 0.5
        %v607 = vmul.f32 %v223, 0.5
        %v608 = vmul.f32 %v224, 0.5
        %v609 = vmul.f32 %v225, 0.5
        %v610 = vmul.f32 %v226, 0.5
        %v611 = vmul.f32 %v227, 0.5
        %v612 = vmul.f32 %v228, 0.5
        %v613 = vmul.f32 %v229, 0.5
        %v614 = vmul.f32 %v230, 0.5
        %v615 = vmul.f32 %v231, 0.5
        %v616 = vmul.f32 %v232, 0.5
        %v617 = vmul.f32 %v233, 0.5
        %v618 = vmul.f32 %v234, 0.5
        %v619 = vmul.f32 %v235, 0.5
        %v620 = vmul.f32 %v236, 0.5
        %v621 = vmul.f32 %v237, 0.5
        %v622 = vmul.f32 %v238, 0.5
        %v623 = vmul.f32 %v239, 0.5
        %v624 = vmul.f32 %v240, 0.5
        %v625 = vmul.f32 %v241, 0.5
        %v626 = vmul.f32 %v242, 0.5
        %v627 = vmul.f32 %v243, 0.5
        %v628 = vmul.f32 %v244, 0.5
        %v629 = vmul.f32 %v245, 0.5
        %v630 = vmul.f32 %v246, 0.5
        %v631 = vmul.f32 %v247, 0.5
        %v632 = vmul.f32 %v248, 0.5
        %v633 = vmul.f32 %v249, 0.5
        %v634 = vmul.f32 %v250, 0.5
        %v635 = vmul.f32 %v251, 0.5
        %v636 = vmul.f32 %v252, 0.5
        %v637 = vmul.f32 %v253, 0.5
        %v638 = vmul.f32 %v254, 0.5
        %v639 = vmul.f32 %v255, 0.5
        %v640 = vmul.f32 %v256, 0.5
        %v641 = vmul.f32 %v257, 0.5
        %v642 = vmul.f32 %v258, 0.5
        %v643 = vmul.f32 %v259, 0.5
        %v644 = vmul.f32 %v260, 0.5
        %v645 = vmul.f32 %v261, 0.5
        %v646 = vmul.f32 %v262, 0.5
        %v647 = vmul.f32 %v263, 0.5
        %v648 = vmul.f32 %v264, 0.5
        %v649 = vmul.f32 %v265, 0.5
        %v650 = vmul.f32 %v266, 0.5
        %v651 = vmul.f32 %v267, 0.5
        %v652 = vmul.f32 %v268, 0.5
        %v653 = vmul.f32 %v269, 0.5
        %v654 = vmul.f32 %v270, 0.5
        %v655 = vmul.f32 %v271, 0.5
        %v656 = vmul.f32 %v272, 0.5
        %v657 = vmul.f32 %v273, 0.5
        %v658 = vmul.f32 %v274, 0.5
        %v659 = vmul.f32 %v275, 0.5
        %v660 = vmul.f32 %v276, 0.5
        %v661 = vmul.f32 %v277, 0.5
        %v662 = vmul.f32 %v278, 0.5
        %v663 = vmul.f32 %v279, 0.5
        %v664 = vmul.f32 %v280, 0.5
        %v665 = vmul.f32 %v281, 0.5
        %v666 = vmul.f32 %v282, 0.5
        %v667 = vmul.f32 %v283, 0.5
        %v668 = vmul.f32 %v284, 0.5
        %v669 = vmul.f32 %v285, 0.5
        %v670 = vmul.f32 %v286, 0.5
        %v671 = vmul.f32 %v287, 0.5
        %v672 = vmul.f32 %v288, 0.5
        %v673 = vmul.f32 %v289, 0.5
        %v674 = vmul.f32 %v290, 0.5
        %v675 = vmul.f32 %v291, 0.5
        %v676 = vmul.f32 %v292, 0.5
        %v677 = vmul.f32 %v293, 0.5
        %v678 = vmul.f32 %v294, 0.5
        %v679 = vmul.f32 %v295, 0.5
        %v680 = vmul.f32 %v296, 0.5
        %v681 = vmul.f32 %v297, 0.5
        %v682 = vmul.f32 %v298, 0.5
        %v683 = vmul.f32 %v299, 0.5
        %v684 = vmul.f32 %v300, 0.5
        %v685 = vmul.f32 %v301, 0.5
        %v686 = vmul.f32 %v302, 0.5
        %v687 = vmul.f32 %v303, 0.5
        %v688 = vmul.f32 %v304, 0.5
        %v689 = vmul.f32 %v305, 0.5
        %v690 = vmul.f32 %v306, 0.5
        %v691 = vmul.f32 %v307, 0.5
        %v692 = vmul.f32 %v308, 0.5
        %v693 = vmul.f32 %v309, 0.5
        %v694 = vmul.f32 %v310, 0.5
        %v695 = vmul.f32 %v311, 0.5
        %v696 = vmul.f32 %v312, 0.5
        %v697 = vmul.f32 %v313, 0.5
        %v698 = vmul.f32 %v314, 0.5
        %v699 = vmul.f32 %v315, 0.5
        %v700 = vmul.f32 %v316, 0.5
        %v701 = vmul.f32 %v317, 0.5
        %v702 = vmul.f32 %v318, 0.5
        %v703 = vmul.f32 %v319, 0.5
        %v704 = vmul.f32 %v320, 0.5
        %v705 = vmul.f32 %v321, 0.5
        %v706 = vmul.f32 %v322, 0.5
        %v707 = vmul.f32 %v323, 0.5
        %v708 = vmul.f32 %v324, 0.5
        %v709 = vmul.f32 %v325, 0.5
        %v710 = vmul.f32 %v326, 0.5
        %v711 = vmul.f32 %v327, 0.5
        %v712 = vmul.f32 %v328, 0.5
        %v713 = vmul.f32 %v329, 0.5
        %v714 = vmul.f32 %v330, 0.5
        %v715 = vmul.f32 %v331, 0.5
        %v716 = vmul.f32 %v332, 0.5
        %v717 = vmul.f32 %v333, 0.5
        %v718 = vmul.f32 %v334, 0.5
        %v719 = vmul.f32 %v335, 0.5
        %v720 = vmul.f32 %v336, 0.5
        %v721 = vmul.f32 %v337, 0.5
        %v722 = vmul.f32 %v338, 0.5
        %v723 = vmul.f32 %v339, 0.5
        %v724 = vmul.f32 %v340, 0.5
        %v725 = vmul.f32 %v341, 0.5
        %v726 = vmul.f32 %v342, 0.5
        %v727 = vmul.f32 %v343, 0.5
        %v728 = vmul.f32 %v344, 0.5
        %v729 = vmul.f32 %v345, 0.5
        %v730 = vmul.f32 %v346, 0.5
        %v731 = vmul.f32 %v347, 0.5
        %v732 = vmul.f32 %v348, 0.5
        %v733 = vmul.f32 %v349, 0.5
        %v734 = vmul.f32 %v350, 0.5
        %v735 = vmul.f32 %v351, 0.5
        %v736 = vmul.f32 %v352, 0.5
        %v737 = vmul.f32 %v353, 0.5
        %v738 = vmul.f32 %v354, 0.5
        %v739 = vmul.f32 %v355, 0.5
        %v740 = vmul.f32 %v356, 0.5
        %v741 = vmul.f32 %v357, 0.5
        %v742 = vmul.f32 %v358, 0.5
        %v743 = vmul.f32 %v359, 0.5
        %v744 = vmul.f32 %v360, 0.5
        %v745 = vmul.f32 %v361, 0.5
        %v746 = vmul.f32 %v362, 0.5
        %v747 = vmul.f32 %v363, 0.5
        %v748 = vmul.f32 %v364, 0.5
        %v749 = vmul.f32 %v365, 0.5
        %v750 = vmul.f32 %v366, 0.5
        %v751 = vmul.f32 %v367, 0.5
        %v752 = vmul.f32 %v368, 0.5
        %v753 = vmul.f32 %v369, 0.5
        %v754 = vmul.f32 %v370, 0.5
        %v755 = vmul.f32 %v371, 0.5
        %v756 = vmul.f32 %v372, 0.5
        %v757 = vmul.f32 %v373, 0.5
        %v758 = vmul.f32 %v374, 0.5
        %v759 = vmul.f32 %v375, 0.5
        %v760 = vmul.f32 %v376, 0.5
        %v761 = vmul.f32 %v377, 0.5
        %v762 = vmul.f32 %v378, 0.5
        %v763 = vmul.f32 %v379, 0.5
        %v764 = vmul.f32 %v380, 0.5
        %v765 = vmul.f32 %v381, 0.5
        %v766 = vmul.f32 %v382, 0.5
        %v767 = vmul.f32 %v383, 0.5
        %v768 = vmul.f32 %v384, 0.5
        %v769 = vmul.f32 %v385, 0.5
        %v770 = vmul.f32 %v386, 0.5
        %v771 = vmul.f32 %v387, 0.5
        %v772 = vmul.f32 %v388, 0.5
        %v773 = vmul.f32 %v389, 0.5
        %v774 = vmul.f32 %v390, 0.5
        %v775 = vmul.f32 %v391, 0.5
        %v776 = vmul.f32 %v392, 0.5
        %v777 = vmul.f32 %v393, 0.5
        %v778 = vmul.f32 %v394, 0.5
        %v779 = vmul.f32 %v395, 0.5
        %v780 = vmul.f32 %v396, 0.5
        %v781 = vmul.f32 %v397, 0.5
        %v782 = vmul.f32 %v398, 0.5
        %v783 = vmul.f32 %v399, 0.5
        %v784 = vmul.f32 %v400, 0.5
        %v785 = vmul.f32 %v401, 0.5
        %v786 = vmul.f32 %v402, 0.5
        %v787 = vmul.f32 %v403, 0.5
        %v788 = vmul.f32 %v404, 0.5
        %v789 = vmul.f32 %v405, 0.5
        %v790 = vmul.f32 %v406, 0.5
        %v791 = vmul.f32 %v407, 0.5
        %v792 = vmul.f32 %v408, 0.5
        %v793 = vmul.f32 %v409, 0.5
        %v794 = vmul.f32 %v410, 0.5
        %v795 = vmul.f32 %v411, 0.5
        %v796 = vmul.f32 %v412, 0.5
        %v797 = vmul.f32 %v413, 0.5
        %v798 = vmul.f32 %v414, 0.5
        %v799 = vmul.f32 %v415, 0.5
        %v800 = vmul.f32 %v416, 0.5
        %v801 = vmul.f32 %v417, 0.5
        %v802 = vmul.f32 %v418, 0.5
        %v803 = vmul.f32 %v419, 0.5
        %v804 = vmul.f32 %v420, 0.5
        %v805 = vmul.f32 %v421, 0.5
        %v806 = vmul.f32 %v422, 0.5
        %v807 = vmul.f32 %v423, 0.5
        %v808 = vmul.f32 %v424, 0.5
        %v809 = vmul.f32 %v425, 0.5
        %v810 = vmul.f32 %v426, 0.5
        %v811 = vmul.f32 %v427, 0.5
        %v812 = vmul.f32 %v428, 0.5
        %v813 = vmul.f32 %v429, 0.5
        %v814 = vmul.f32 %v430, 0.5
        %v815 = vmul.f32 %v431, 0.5
        %v816 = vmul.f32 %v432, 0.5
        %v817 = vmul.f32 %v433, 0.5
        %v818 = vmul.f32 %v434, 0.5
        %v819 = vmul.f32 %v435, 0.5
        %v820 = vmul.f32 %v436, 0.5
        %v821 = vmul.f32 %v437, 0.5
        %v822 = vmul.f32 %v438, 0.5
        %v823 = vmul.f32 %v439, 0.5
        %v824 = vmul.f32 %v440, 0.5
        %v825 = vmul.f32 %v441, 0.5
        %v826 = vmul.f32 %v442, 0.5
        %v827 = vmul.f32 %v443, 0.5
        %v828 = vmul.f32 %v444, 0.5
        %v829 = vmul.f32 %v445, 0.5
        %v830 = vmul.f32 %v446, 0.5
        %v831 = vmul.f32 %v447, 0.5
        %v832 = vmul.f32 %v448, 0.5
        %v833 = vmul.f32 %v449, 0.5
        %v834 = vmul.f32 %v450, 0.5
        %v835 = vmul.f32 %v451, 0.5
        %v836 = vmul.f32 %v452, 0.5
        %v837 = vmul.f32 %v453, 0.5
        %v838 = vmul.f32 %v454, 0.5
        %v839 = vmul.f32 %v455, 0.5
        %v840 = vmul.f32 %v456, 0.5
        %v841 = vmul.f32 %v457, 0.5
        %v842 = vmul.f32 %v458, 0.5
        %v843 = vmul.f32 %v459, 0.5
        %v844 = vmul.f32 %v460, 0.5
        %v845 = vmul.f32 %v461, 0.5
        %v846 = vmul.f32 %v462, 0.5
        %v847 = vmul.f32 %v463, 0.5
        %v848 = vmul.f32 %v464, 0.5
        %v849 = vmul.f32 %v465, 0.5
        %v850 = vmul.f32 %v466, 0.5
        %v851 = vmul.f32 %v467, 0.5
        %v852 = vmul.f32 %v468, 0.5
        %v853 = vmul.f32 %v469, 0.5
        %v854 = vmul.f32 %v470, 0.5
        %v855 = vmul.f32 %v471, 0.5
        %v856 = vmul.f32 %v472, 0.5
        %v857 = vmul.f32 %v473, 0.5
        %v858 = vmul.f32 %v474, 0.5
        %v859 = vmul.f32 %v475, 0.5
        %v860 = vmul.f32 %v476, 0.5
        %v861 = vmul.f32 %v477, 0.5
        %v862 = vmul.f32 %v478, 0.5
        %v863 = vmul.f32 %v479, 0.5
        %v864 = vmul.f32 %v480, 0.5
        %v865 = vmul.f32 %v481, 0.5
        %v866 = vmul.f32 %v482, 0.5
        %v867 = vmul.f32 %v483, 0.5
        %v868 = vmul.f32 %v484, 0.5
        %v869 = vmul.f32 %v485, 0.5
        %v870 = vmul.f32 %v486, 0.5
        %v871 = vmul.f32 %v487, 0.5
        %v872 = vmul.f32 %v488, 0.5
        %v873 = vmul.f32 %v489, 0.5
        %v874 = vmul.f32 %v490, 0.5
        %v875 = vmul.f32 %v491, 0.5
        %v876 = vmul.f32 %v492, 0.5
        %v877 = vmul.f32 %v493, 0.5
        %v878 = vmul.f32 %v494, 0.5
        %v879 = vmul.f32 %v495, 0.5
        %v880 = vmul.f32 %v496, 0.5
        %v881 = vmul.f32 %v497, 0.5
        %v882 = vmul.f32 %v498, 0.5
        %v883 = vmul.f32 %v499, 0.5
        %v884 = vmul.f32 %v500, 0.5
        %v885 = vmul.f32 %v501, 0.5
        %v886 = vmul.f32 %v502, 0.5
        %v887 = vmul.f32 %v503, 0.5
        %v888 = vmul.f32 %v504, 0.5
        %v889 = vmul.f32 %v505, 0.5
        %v890 = vmul.f32 %v506, 0.5
        %v891 = vmul.f32 %v507, 0.5
        %v892 = vmul.f32 %v508, 0.5
        %v893 = vmul.f32 %v509, 0.5
        %v894 = vmul.f32 %v510, 0.5
        %v895 = vmul.f32 %v511, 0.5
        %v896 = vmul.f32 %v512, 0.5
        %v897 = vmul.f32 %v513, 0.5
        %v898 = vmul.f32 %v514, 0.5
        %v899 = vmul.f32 %v515, 0.5
        %v900 = vmul.f32 %v516, 0.5
        %v901 = vmul.f32 %v517, 0.5
        %v902 = vmul.f32 %v518, 0.5
        %v903 = vmul.f32 %v519, 0.5
        %v904 = vmul.f32 %v520, 0.5
        %v905 = vmul.f32 %v521, 0.5
        %v906 = vmul.f32 %v138, 0.70710677
        %v907 = vmul.f32 %v139, 0.70710677
        %v908 = vmul.f32 %v140, 0.70710677
        %v909 = vmul.f32 %v141, 0.70710677
        %v910 = vmul.f32 %v142, 0.70710677
        %v911 = vmul.f32 %v143, 0.70710677
        %v912 = vmul.f32 %v144, 0.70710677
        %v913 = vmul.f32 %v145, 0.70710677
        %v914 = vmul.f32 %v146, 0.70710677
        %v915 = vmul.f32 %v147, 0.70710677
        %v916 = vmul.f32 %v148, 0.70710677
        %v917 = vmul.f32 %v149, 0.70710677
        %v918 = vmul.f32 %v150, 0.70710677
        %v919 = vmul.f32 %v151, 0.70710677
        %v920 = vmul.f32 %v152, 0.70710677
        %v921 = vmul.f32 %v153, 0.70710677
        %v922 = vmul.f32 %v154, 0.70710677
        %v923 = vmul.f32 %v155, 0.70710677
        %v924 = vmul.f32 %v156, 0.70710677
        %v925 = vmul.f32 %v157, 0.70710677
        %v926 = vmul.f32 %v158, 0.70710677
        %v927 = vmul.f32 %v159, 0.70710677
        %v928 = vmul.f32 %v160, 0.70710677
        %v929 = vmul.f32 %v161, 0.70710677
        %v930 = vmul.f32 %v162, 0.70710677
        %v931 = vmul.f32 %v163, 0.70710677
        %v932 = vmul.f32 %v164, 0.70710677
        %v933 = vmul.f32 %v165, 0.70710677
        %v934 = vmul.f32 %v166, 0.70710677
        %v935 = vmul.f32 %v167, 0.70710677
        %v936 = vmul.f32 %v168, 0.70710677
        %v937 = vmul.f32 %v169, 0.70710677
        %v938 = vmul.f32 %v170, 0.70710677
        %v939 = vmul.f32 %v171, 0.70710677
        %v940 = vmul.f32 %v172, 0.70710677
        %v941 = vmul.f32 %v173, 0.70710677
        %v942 = vmul.f32 %v174, 0.70710677
        %v943 = vmul.f32 %v175, 0.70710677
        %v944 = vmul.f32 %v176, 0.70710677
        %v945 = vmul.f32 %v177, 0.70710677
        %v946 = vmul.f32 %v178, 0.70710677
        %v947 = vmul.f32 %v179, 0.70710677
        %v948 = vmul.f32 %v180, 0.70710677
        %v949 = vmul.f32 %v181, 0.70710677
        %v950 = vmul.f32 %v182, 0.70710677
        %v951 = vmul.f32 %v183, 0.70710677
        %v952 = vmul.f32 %v184, 0.70710677
        %v953 = vmul.f32 %v185, 0.70710677
        %v954 = vmul.f32 %v186, 0.70710677
        %v955 = vmul.f32 %v187, 0.70710677
        %v956 = vmul.f32 %v188, 0.70710677
        %v957 = vmul.f32 %v189, 0.70710677
        %v958 = vmul.f32 %v190, 0.70710677
        %v959 = vmul.f32 %v191, 0.70710677
        %v960 = vmul.f32 %v192, 0.70710677
        %v961 = vmul.f32 %v193, 0.70710677
        %v962 = vmul.f32 %v194, 0.70710677
        %v963 = vmul.f32 %v195, 0.70710677
        %v964 = vmul.f32 %v196, 0.70710677
        %v965 = vmul.f32 %v197, 0.70710677
        %v966 = vmul.f32 %v198, 0.70710677
        %v967 = vmul.f32 %v199, 0.70710677
        %v968 = vmul.f32 %v200, 0.70710677
        %v969 = vmul.f32 %v201, 0.70710677
        %v970 = vmul.f32 %v202, 0.70710677
        %v971 = vmul.f32 %v203, 0.70710677
        %v972 = vmul.f32 %v204, 0.70710677
        %v973 = vmul.f32 %v205, 0.70710677
        %v974 = vmul.f32 %v206, 0.70710677
        %v975 = vmul.f32 %v207, 0.70710677
        %v976 = vmul.f32 %v208, 0.70710677
        %v977 = vmul.f32 %v209, 0.70710677
        %v978 = vmul.f32 %v210, 0.70710677
        %v979 = vmul.f32 %v211, 0.70710677
        %v980 = vmul.f32 %v212, 0.70710677
        %v981 = vmul.f32 %v213, 0.70710677
        %v982 = vmul.f32 %v214, 0.70710677
        %v983 = vmul.f32 %v215, 0.70710677
        %v984 = vmul.f32 %v216, 0.70710677
        %v985 = vmul.f32 %v217, 0.70710677
        %v986 = vmul.f32 %v218, 0.70710677
        %v987 = vmul.f32 %v219, 0.70710677
        %v988 = vmul.f32 %v220, 0.70710677
        %v989 = vmul.f32 %v221, 0.70710677
        %v990 = vmul.f32 %v222, 0.70710677
        %v991 = vmul.f32 %v223, 0.70710677
        %v992 = vmul.f32 %v224, 0.70710677
        %v993 = vmul.f32 %v225, 0.70710677
        %v994 = vmul.f32 %v226, 0.70710677
        %v995 = vmul.f32 %v227, 0.70710677
        %v996 = vmul.f32 %v228, 0.70710677
        %v997 = vmul.f32 %v229, 0.70710677
        %v998 = vmul.f32 %v230, 0.70710677
        %v999 = vmul.f32 %v231, 0.70710677
        %v1000 = vmul.f32 %v232, 0.70710677
        %v1001 = vmul.f32 %v233, 0.70710677
        %v1002 = vmul.f32 %v234, 0.70710677
        %v1003 = vmul.f32 %v235, 0.70710677
        %v1004 = vmul.f32 %v236, 0.70710677
        %v1005 = vmul.f32 %v237, 0.70710677
        %v1006 = vmul.f32 %v238, 0.70710677
        %v1007 = vmul.f32 %v239, 0.70710677
        %v1008 = vmul.f32 %v240, 0.70710677
        %v1009 = vmul.f32 %v241, 0.70710677
        %v1010 = vmul.f32 %v242, 0.70710677
        %v1011 = vmul.f32 %v243, 0.70710677
        %v1012 = vmul.f32 %v244, 0.70710677
        %v1013 = vmul.f32 %v245, 0.70710677
        %v1014 = vmul.f32 %v246, 0.70710677
        %v1015 = vmul.f32 %v247, 0.70710677
        %v1016 = vmul.f32 %v248, 0.70710677
        %v1017 = vmul.f32 %v249, 0.70710677
        %v1018 = vmul.f32 %v250, 0.70710677
        %v1019 = vmul.f32 %v251, 0.70710677
        %v1020 = vmul.f32 %v252, 0.70710677
        %v1021 = vmul.f32 %v253, 0.70710677
        %v1022 = vmul.f32 %v254, 0.70710677
        %v1023 = vmul.f32 %v255, 0.70710677
        %v1024 = vmul.f32 %v256, 0.70710677
        %v1025 = vmul.f32 %v257, 0.70710677
        %v1026 = vmul.f32 %v258, 0.70710677
        %v1027 = vmul.f32 %v259, 0.70710677
        %v1028 = vmul.f32 %v260, 0.70710677
        %v1029 = vmul.f32 %v261, 0.70710677
        %v1030 = vmul.f32 %v262, 0.70710677
        %v1031 = vmul.f32 %v263, 0.70710677
        %v1032 = vmul.f32 %v264, 0.70710677
        %v1033 = vmul.f32 %v265, 0.70710677
        %v1034 = vmul.f32 %v266, 0.70710677
        %v1035 = vmul.f32 %v267, 0.70710677
        %v1036 = vmul.f32 %v268, 0.70710677
        %v1037 = vmul.f32 %v269, 0.70710677
        %v1038 = vmul.f32 %v270, 0.70710677
        %v1039 = vmul.f32 %v271, 0.70710677
        %v1040 = vmul.f32 %v272, 0.70710677
        %v1041 = vmul.f32 %v273, 0.70710677
        %v1042 = vmul.f32 %v274, 0.70710677
        %v1043 = vmul.f32 %v275, 0.70710677
        %v1044 = vmul.f32 %v276, 0.70710677
        %v1045 = vmul.f32 %v277, 0.70710677
        %v1046 = vmul.f32 %v278, 0.70710677
        %v1047 = vmul.f32 %v279, 0.70710677
        %v1048 = vmul.f32 %v280, 0.70710677
        %v1049 = vmul.f32 %v281, 0.70710677
        %v1050 = vmul.f32 %v282, 0.70710677
        %v1051 = vmul.f32 %v283, 0.70710677
        %v1052 = vmul.f32 %v284, 0.70710677
        %v1053 = vmul.f32 %v285, 0.70710677
        %v1054 = vmul.f32 %v286, 0.70710677
        %v1055 = vmul.f32 %v287, 0.70710677
        %v1056 = vmul.f32 %v288, 0.70710677
        %v1057 = vmul.f32 %v289, 0.70710677
        %v1058 = vmul.f32 %v290, 0.70710677
        %v1059 = vmul.f32 %v291, 0.70710677
        %v1060 = vmul.f32 %v292, 0.70710677
        %v1061 = vmul.f32 %v293, 0.70710677
        %v1062 = vmul.f32 %v294, 0.70710677
        %v1063 = vmul.f32 %v295, 0.70710677
        %v1064 = vmul.f32 %v296, 0.70710677
        %v1065 = vmul.f32 %v297, 0.70710677
        %v1066 = vmul.f32 %v298, 0.70710677
        %v1067 = vmul.f32 %v299, 0.70710677
        %v1068 = vmul.f32 %v300, 0.70710677
        %v1069 = vmul.f32 %v301, 0.70710677
        %v1070 = vmul.f32 %v302, 0.70710677
        %v1071 = vmul.f32 %v303, 0.70710677
        %v1072 = vmul.f32 %v304, 0.70710677
        %v1073 = vmul.f32 %v305, 0.70710677
        %v1074 = vmul.f32 %v306, 0.70710677
        %v1075 = vmul.f32 %v307, 0.70710677
        %v1076 = vmul.f32 %v308, 0.70710677
        %v1077 = vmul.f32 %v309, 0.70710677
        %v1078 = vmul.f32 %v310, 0.70710677
        %v1079 = vmul.f32 %v311, 0.70710677
        %v1080 = vmul.f32 %v312, 0.70710677
        %v1081 = vmul.f32 %v313, 0.70710677
        %v1082 = vmul.f32 %v314, 0.70710677
        %v1083 = vmul.f32 %v315, 0.70710677
        %v1084 = vmul.f32 %v316, 0.70710677
        %v1085 = vmul.f32 %v317, 0.70710677
        %v1086 = vmul.f32 %v318, 0.70710677
        %v1087 = vmul.f32 %v319, 0.70710677
        %v1088 = vmul.f32 %v320, 0.70710677
        %v1089 = vmul.f32 %v321, 0.70710677
        %v1090 = vmul.f32 %v322, 0.70710677
        %v1091 = vmul.f32 %v323, 0.70710677
        %v1092 = vmul.f32 %v324, 0.70710677
        %v1093 = vmul.f32 %v325, 0.70710677
        %v1094 = vmul.f32 %v326, 0.70710677
        %v1095 = vmul.f32 %v327, 0.70710677
        %v1096 = vmul.f32 %v328, 0.70710677
        %v1097 = vmul.f32 %v329, 0.70710677
        %v1098 = vmul.f32 %v330, 0.70710677
        %v1099 = vmul.f32 %v331, 0.70710677
        %v1100 = vmul.f32 %v332, 0.70710677
        %v1101 = vmul.f32 %v333, 0.70710677
        %v1102 = vmul.f32 %v334, 0.70710677
        %v1103 = vmul.f32 %v335, 0.70710677
        %v1104 = vmul.f32 %v336, 0.70710677
        %v1105 = vmul.f32 %v337, 0.70710677
        %v1106 = vmul.f32 %v338, 0.70710677
        %v1107 = vmul.f32 %v339, 0.70710677
        %v1108 = vmul.f32 %v340, 0.70710677
        %v1109 = vmul.f32 %v341, 0.70710677
        %v1110 = vmul.f32 %v342, 0.70710677
        %v1111 = vmul.f32 %v343, 0.70710677
        %v1112 = vmul.f32 %v344, 0.70710677
        %v1113 = vmul.f32 %v345, 0.70710677
        %v1114 = vmul.f32 %v346, 0.70710677
        %v1115 = vmul.f32 %v347, 0.70710677
        %v1116 = vmul.f32 %v348, 0.70710677
        %v1117 = vmul.f32 %v349, 0.70710677
        %v1118 = vmul.f32 %v350, 0.70710677
        %v1119 = vmul.f32 %v351, 0.70710677
        %v1120 = vmul.f32 %v352, 0.70710677
        %v1121 = vmul.f32 %v353, 0.70710677
        %v1122 = vmul.f32 %v354, 0.70710677
        %v1123 = vmul.f32 %v355, 0.70710677
        %v1124 = vmul.f32 %v356, 0.70710677
        %v1125 = vmul.f32 %v357, 0.70710677
        %v1126 = vmul.f32 %v358, 0.70710677
        %v1127 = vmul.f32 %v359, 0.70710677
        %v1128 = vmul.f32 %v360, 0.70710677
        %v1129 = vmul.f32 %v361, 0.70710677
        %v1130 = vmul.f32 %v362, 0.70710677
        %v1131 = vmul.f32 %v363, 0.70710677
        %v1132 = vmul.f32 %v364, 0.70710677
        %v1133 = vmul.f32 %v365, 0.70710677
        %v1134 = vmul.f32 %v366, 0.70710677
        %v1135 = vmul.f32 %v367, 0.70710677
        %v1136 = vmul.f32 %v368, 0.70710677
        %v1137 = vmul.f32 %v369, 0.70710677
        %v1138 = vmul.f32 %v370, 0.70710677
        %v1139 = vmul.f32 %v371, 0.70710677
        %v1140 = vmul.f32 %v372, 0.70710677
        %v1141 = vmul.f32 %v373, 0.70710677
        %v1142 = vmul.f32 %v374, 0.70710677
        %v1143 = vmul.f32 %v375, 0.70710677
        %v1144 = vmul.f32 %v376, 0.70710677
        %v1145 = vmul.f32 %v377, 0.70710677
        %v1146 = vmul.f32 %v378, 0.70710677
        %v1147 = vmul.f32 %v379, 0.70710677
        %v1148 = vmul.f32 %v380, 0.70710677
        %v1149 = vmul.f32 %v381, 0.70710677
        %v1150 = vmul.f32 %v382, 0.70710677
        %v1151 = vmul.f32 %v383, 0.70710677
        %v1152 = vmul.f32 %v384, 0.70710677
        %v1153 = vmul.f32 %v385, 0.70710677
        %v1154 = vmul.f32 %v386, 0.70710677
        %v1155 = vmul.f32 %v387, 0.70710677
        %v1156 = vmul.f32 %v388, 0.70710677
        %v1157 = vmul.f32 %v389, 0.70710677
        %v1158 = vmul.f32 %v390, 0.70710677
        %v1159 = vmul.f32 %v391, 0.70710677
        %v1160 = vmul.f32 %v392, 0.70710677
        %v1161 = vmul.f32 %v393, 0.70710677
        %v1162 = vmul.f32 %v394, 0.70710677
        %v1163 = vmul.f32 %v395, 0.70710677
        %v1164 = vmul.f32 %v396, 0.70710677
        %v1165 = vmul.f32 %v397, 0.70710677
        %v1166 = vmul.f32 %v398, 0.70710677
        %v1167 = vmul.f32 %v399, 0.70710677
        %v1168 = vmul.f32 %v400, 0.70710677
        %v1169 = vmul.f32 %v401, 0.70710677
        %v1170 = vmul.f32 %v402, 0.70710677
        %v1171 = vmul.f32 %v403, 0.70710677
        %v1172 = vmul.f32 %v404, 0.70710677
        %v1173 = vmul.f32 %v405, 0.70710677
        %v1174 = vmul.f32 %v406, 0.70710677
        %v1175 = vmul.f32 %v407, 0.70710677
        %v1176 = vmul.f32 %v408, 0.70710677
        %v1177 = vmul.f32 %v409, 0.70710677
        %v1178 = vmul.f32 %v410, 0.70710677
        %v1179 = vmul.f32 %v411, 0.70710677
        %v1180 = vmul.f32 %v412, 0.70710677
        %v1181 = vmul.f32 %v413, 0.70710677
        %v1182 = vmul.f32 %v414, 0.70710677
        %v1183 = vmul.f32 %v415, 0.70710677
        %v1184 = vmul.f32 %v416, 0.70710677
        %v1185 = vmul.f32 %v417, 0.70710677
        %v1186 = vmul.f32 %v418, 0.70710677
        %v1187 = vmul.f32 %v419, 0.70710677
        %v1188 = vmul.f32 %v420, 0.70710677
        %v1189 = vmul.f32 %v421, 0.70710677
        %v1190 = vmul.f32 %v422, 0.70710677
        %v1191 = vmul.f32 %v423, 0.70710677
        %v1192 = vmul.f32 %v424, 0.70710677
        %v1193 = vmul.f32 %v425, 0.70710677
        %v1194 = vmul.f32 %v426, 0.70710677
        %v1195 = vmul.f32 %v427, 0.70710677
        %v1196 = vmul.f32 %v428, 0.70710677
        %v1197 = vmul.f32 %v429, 0.70710677
        %v1198 = vmul.f32 %v430, 0.70710677
        %v1199 = vmul.f32 %v431, 0.70710677
        %v1200 = vmul.f32 %v432, 0.70710677
        %v1201 = vmul.f32 %v433, 0.70710677
        %v1202 = vmul.f32 %v434, 0.70710677
        %v1203 = vmul.f32 %v435, 0.70710677
        %v1204 = vmul.f32 %v436, 0.70710677
        %v1205 = vmul.f32 %v437, 0.70710677
        %v1206 = vmul.f32 %v438, 0.70710677
        %v1207 = vmul.f32 %v439, 0.70710677
        %v1208 = vmul.f32 %v440, 0.70710677
        %v1209 = vmul.f32 %v441, 0.70710677
        %v1210 = vmul.f32 %v442, 0.70710677
        %v1211 = vmul.f32 %v443, 0.70710677
        %v1212 = vmul.f32 %v444, 0.70710677
        %v1213 = vmul.f32 %v445, 0.70710677
        %v1214 = vmul.f32 %v446, 0.70710677
        %v1215 = vmul.f32 %v447, 0.70710677
        %v1216 = vmul.f32 %v448, 0.70710677
        %v1217 = vmul.f32 %v449, 0.70710677
        %v1218 = vmul.f32 %v450, 0.70710677
        %v1219 = vmul.f32 %v451, 0.70710677
        %v1220 = vmul.f32 %v452, 0.70710677
        %v1221 = vmul.f32 %v453, 0.70710677
        %v1222 = vmul.f32 %v454, 0.70710677
        %v1223 = vmul.f32 %v455, 0.70710677
        %v1224 = vmul.f32 %v456, 0.70710677
        %v1225 = vmul.f32 %v457, 0.70710677
        %v1226 = vmul.f32 %v458, 0.70710677
        %v1227 = vmul.f32 %v459, 0.70710677
        %v1228 = vmul.f32 %v460, 0.70710677
        %v1229 = vmul.f32 %v461, 0.70710677
        %v1230 = vmul.f32 %v462, 0.70710677
        %v1231 = vmul.f32 %v463, 0.70710677
        %v1232 = vmul.f32 %v464, 0.70710677
        %v1233 = vmul.f32 %v465, 0.70710677
        %v1234 = vmul.f32 %v466, 0.70710677
        %v1235 = vmul.f32 %v467, 0.70710677
        %v1236 = vmul.f32 %v468, 0.70710677
        %v1237 = vmul.f32 %v469, 0.70710677
        %v1238 = vmul.f32 %v470, 0.70710677
        %v1239 = vmul.f32 %v471, 0.70710677
        %v1240 = vmul.f32 %v472, 0.70710677
        %v1241 = vmul.f32 %v473, 0.70710677
        %v1242 = vmul.f32 %v474, 0.70710677
        %v1243 = vmul.f32 %v475, 0.70710677
        %v1244 = vmul.f32 %v476, 0.70710677
        %v1245 = vmul.f32 %v477, 0.70710677
        %v1246 = vmul.f32 %v478, 0.70710677
        %v1247 = vmul.f32 %v479, 0.70710677
        %v1248 = vmul.f32 %v480, 0.70710677
        %v1249 = vmul.f32 %v481, 0.70710677
        %v1250 = vmul.f32 %v482, 0.70710677
        %v1251 = vmul.f32 %v483, 0.70710677
        %v1252 = vmul.f32 %v484, 0.70710677
        %v1253 = vmul.f32 %v485, 0.70710677
        %v1254 = vmul.f32 %v486, 0.70710677
        %v1255 = vmul.f32 %v487, 0.70710677
        %v1256 = vmul.f32 %v488, 0.70710677
        %v1257 = vmul.f32 %v489, 0.70710677
        %v1258 = vmul.f32 %v490, 0.70710677
        %v1259 = vmul.f32 %v491, 0.70710677
        %v1260 = vmul.f32 %v492, 0.70710677
        %v1261 = vmul.f32 %v493, 0.70710677
        %v1262 = vmul.f32 %v494, 0.70710677
        %v1263 = vmul.f32 %v495, 0.70710677
        %v1264 = vmul.f32 %v496, 0.70710677
        %v1265 = vmul.f32 %v497, 0.70710677
        %v1266 = vmul.f32 %v498, 0.70710677
        %v1267 = vmul.f32 %v499, 0.70710677
        %v1268 = vmul.f32 %v500, 0.70710677
        %v1269 = vmul.f32 %v501, 0.70710677
        %v1270 = vmul.f32 %v502, 0.70710677
        %v1271 = vmul.f32 %v503, 0.70710677
        %v1272 = vmul.f32 %v504, 0.70710677
        %v1273 = vmul.f32 %v505, 0.70710677
        %v1274 = vmul.f32 %v506, 0.70710677
        %v1275 = vmul.f32 %v507, 0.70710677
        %v1276 = vmul.f32 %v508, 0.70710677
        %v1277 = vmul.f32 %v509, 0.70710677
        %v1278 = vmul.f32 %v510, 0.70710677
        %v1279 = vmul.f32 %v511, 0.70710677
        %v1280 = vmul.f32 %v512, 0.70710677
        %v1281 = vmul.f32 %v513, 0.70710677
        %v1282 = vmul.f32 %v514, 0.70710677
        %v1283 = vmul.f32 %v515, 0.70710677
        %v1284 = vmul.f32 %v516, 0.70710677
        %v1285 = vmul.f32 %v517, 0.70710677
        %v1286 = vmul.f32 %v518, 0.70710677
        %v1287 = vmul.f32 %v519, 0.70710677
        %v1288 = vmul.f32 %v520, 0.70710677
        %v1289 = vmul.f32 %v521, 0.70710677
        %v1290 = verf.f32.pop %v906
        %v1291 = verf.f32.pop %v907
        %v1292 = verf.f32.pop %v908
        %v1293 = verf.f32.pop %v909
        %v1294 = verf.f32.pop %v910
        %v1295 = verf.f32.pop %v911
        %v1296 = verf.f32.pop %v912
        %v1297 = verf.f32.pop %v913
        %v1298 = verf.f32.pop %v914
        %v1299 = verf.f32.pop %v915
        %v1300 = verf.f32.pop %v916
        %v1301 = verf.f32.pop %v917
        %v1302 = verf.f32.pop %v918
        %v1303 = verf.f32.pop %v919
        %v1304 = verf.f32.pop %v920
        %v1305 = verf.f32.pop %v921
        %v1306 = verf.f32.pop %v922
        %v1307 = verf.f32.pop %v923
        %v1308 = verf.f32.pop %v924
        %v1309 = verf.f32.pop %v925
        %v1310 = verf.f32.pop %v926
        %v1311 = verf.f32.pop %v927
        %v1312 = verf.f32.pop %v928
        %v1313 = verf.f32.pop %v929
        %v1314 = verf.f32.pop %v930
        %v1315 = verf.f32.pop %v931
        %v1316 = verf.f32.pop %v932
        %v1317 = verf.f32.pop %v933
        %v1318 = verf.f32.pop %v934
        %v1319 = verf.f32.pop %v935
        %v1320 = verf.f32.pop %v936
        %v1321 = verf.f32.pop %v937
        %v1322 = verf.f32.pop %v938
        %v1323 = verf.f32.pop %v939
        %v1324 = verf.f32.pop %v940
        %v1325 = verf.f32.pop %v941
        %v1326 = verf.f32.pop %v942
        %v1327 = verf.f32.pop %v943
        %v1328 = verf.f32.pop %v944
        %v1329 = verf.f32.pop %v945
        %v1330 = verf.f32.pop %v946
        %v1331 = verf.f32.pop %v947
        %v1332 = verf.f32.pop %v948
        %v1333 = verf.f32.pop %v949
        %v1334 = verf.f32.pop %v950
        %v1335 = verf.f32.pop %v951
        %v1336 = verf.f32.pop %v952
        %v1337 = verf.f32.pop %v953
        %v1338 = verf.f32.pop %v954
        %v1339 = verf.f32.pop %v955
        %v1340 = verf.f32.pop %v956
        %v1341 = verf.f32.pop %v957
        %v1342 = verf.f32.pop %v958
        %v1343 = verf.f32.pop %v959
        %v1344 = verf.f32.pop %v960
        %v1345 = verf.f32.pop %v961
        %v1346 = verf.f32.pop %v962
        %v1347 = verf.f32.pop %v963
        %v1348 = verf.f32.pop %v964
        %v1349 = verf.f32.pop %v965
        %v1350 = verf.f32.pop %v966
        %v1351 = verf.f32.pop %v967
        %v1352 = verf.f32.pop %v968
        %v1353 = verf.f32.pop %v969
        %v1354 = verf.f32.pop %v970
        %v1355 = verf.f32.pop %v971
        %v1356 = verf.f32.pop %v972
        %v1357 = verf.f32.pop %v973
        %v1358 = verf.f32.pop %v974
        %v1359 = verf.f32.pop %v975
        %v1360 = verf.f32.pop %v976
        %v1361 = verf.f32.pop %v977
        %v1362 = verf.f32.pop %v978
        %v1363 = verf.f32.pop %v979
        %v1364 = verf.f32.pop %v980
        %v1365 = verf.f32.pop %v981
        %v1366 = verf.f32.pop %v982
        %v1367 = verf.f32.pop %v983
        %v1368 = verf.f32.pop %v984
        %v1369 = verf.f32.pop %v985
        %v1370 = verf.f32.pop %v986
        %v1371 = verf.f32.pop %v987
        %v1372 = verf.f32.pop %v988
        %v1373 = verf.f32.pop %v989
        %v1374 = verf.f32.pop %v990
        %v1375 = verf.f32.pop %v991
        %v1376 = verf.f32.pop %v992
        %v1377 = verf.f32.pop %v993
        %v1378 = verf.f32.pop %v994
        %v1379 = verf.f32.pop %v995
        %v1380 = verf.f32.pop %v996
        %v1381 = verf.f32.pop %v997
        %v1382 = verf.f32.pop %v998
        %v1383 = verf.f32.pop %v999
        %v1384 = verf.f32.pop %v1000
        %v1385 = verf.f32.pop %v1001
        %v1386 = verf.f32.pop %v1002
        %v1387 = verf.f32.pop %v1003
        %v1388 = verf.f32.pop %v1004
        %v1389 = verf.f32.pop %v1005
        %v1390 = verf.f32.pop %v1006
        %v1391 = verf.f32.pop %v1007
        %v1392 = verf.f32.pop %v1008
        %v1393 = verf.f32.pop %v1009
        %v1394 = verf.f32.pop %v1010
        %v1395 = verf.f32.pop %v1011
        %v1396 = verf.f32.pop %v1012
        %v1397 = verf.f32.pop %v1013
        %v1398 = verf.f32.pop %v1014
        %v1399 = verf.f32.pop %v1015
        %v1400 = verf.f32.pop %v1016
        %v1401 = verf.f32.pop %v1017
        %v1402 = verf.f32.pop %v1018
        %v1403 = verf.f32.pop %v1019
        %v1404 = verf.f32.pop %v1020
        %v1405 = verf.f32.pop %v1021
        %v1406 = verf.f32.pop %v1022
        %v1407 = verf.f32.pop %v1023
        %v1408 = verf.f32.pop %v1024
        %v1409 = verf.f32.pop %v1025
        %v1410 = verf.f32.pop %v1026
        %v1411 = verf.f32.pop %v1027
        %v1412 = verf.f32.pop %v1028
        %v1413 = verf.f32.pop %v1029
        %v1414 = verf.f32.pop %v1030
        %v1415 = verf.f32.pop %v1031
        %v1416 = verf.f32.pop %v1032
        %v1417 = verf.f32.pop %v1033
        %v1418 = verf.f32.pop %v1034
        %v1419 = verf.f32.pop %v1035
        %v1420 = verf.f32.pop %v1036
        %v1421 = verf.f32.pop %v1037
        %v1422 = verf.f32.pop %v1038
        %v1423 = verf.f32.pop %v1039
        %v1424 = verf.f32.pop %v1040
        %v1425 = verf.f32.pop %v1041
        %v1426 = verf.f32.pop %v1042
        %v1427 = verf.f32.pop %v1043
        %v1428 = verf.f32.pop %v1044
        %v1429 = verf.f32.pop %v1045
        %v1430 = verf.f32.pop %v1046
        %v1431 = verf.f32.pop %v1047
        %v1432 = verf.f32.pop %v1048
        %v1433 = verf.f32.pop %v1049
        %v1434 = verf.f32.pop %v1050
        %v1435 = verf.f32.pop %v1051
        %v1436 = verf.f32.pop %v1052
        %v1437 = verf.f32.pop %v1053
        %v1438 = verf.f32.pop %v1054
        %v1439 = verf.f32.pop %v1055
        %v1440 = verf.f32.pop %v1056
        %v1441 = verf.f32.pop %v1057
        %v1442 = verf.f32.pop %v1058
        %v1443 = verf.f32.pop %v1059
        %v1444 = verf.f32.pop %v1060
        %v1445 = verf.f32.pop %v1061
        %v1446 = verf.f32.pop %v1062
        %v1447 = verf.f32.pop %v1063
        %v1448 = verf.f32.pop %v1064
        %v1449 = verf.f32.pop %v1065
        %v1450 = verf.f32.pop %v1066
        %v1451 = verf.f32.pop %v1067
        %v1452 = verf.f32.pop %v1068
        %v1453 = verf.f32.pop %v1069
        %v1454 = verf.f32.pop %v1070
        %v1455 = verf.f32.pop %v1071
        %v1456 = verf.f32.pop %v1072
        %v1457 = verf.f32.pop %v1073
        %v1458 = verf.f32.pop %v1074
        %v1459 = verf.f32.pop %v1075
        %v1460 = verf.f32.pop %v1076
        %v1461 = verf.f32.pop %v1077
        %v1462 = verf.f32.pop %v1078
        %v1463 = verf.f32.pop %v1079
        %v1464 = verf.f32.pop %v1080
        %v1465 = verf.f32.pop %v1081
        %v1466 = verf.f32.pop %v1082
        %v1467 = verf.f32.pop %v1083
        %v1468 = verf.f32.pop %v1084
        %v1469 = verf.f32.pop %v1085
        %v1470 = verf.f32.pop %v1086
        %v1471 = verf.f32.pop %v1087
        %v1472 = verf.f32.pop %v1088
        %v1473 = verf.f32.pop %v1089
        %v1474 = verf.f32.pop %v1090
        %v1475 = verf.f32.pop %v1091
        %v1476 = verf.f32.pop %v1092
        %v1477 = verf.f32.pop %v1093
        %v1478 = verf.f32.pop %v1094
        %v1479 = verf.f32.pop %v1095
        %v1480 = verf.f32.pop %v1096
        %v1481 = verf.f32.pop %v1097
        %v1482 = verf.f32.pop %v1098
        %v1483 = verf.f32.pop %v1099
        %v1484 = verf.f32.pop %v1100
        %v1485 = verf.f32.pop %v1101
        %v1486 = verf.f32.pop %v1102
        %v1487 = verf.f32.pop %v1103
        %v1488 = verf.f32.pop %v1104
        %v1489 = verf.f32.pop %v1105
        %v1490 = verf.f32.pop %v1106
        %v1491 = verf.f32.pop %v1107
        %v1492 = verf.f32.pop %v1108
        %v1493 = verf.f32.pop %v1109
        %v1494 = verf.f32.pop %v1110
        %v1495 = verf.f32.pop %v1111
        %v1496 = verf.f32.pop %v1112
        %v1497 = verf.f32.pop %v1113
        %v1498 = verf.f32.pop %v1114
        %v1499 = verf.f32.pop %v1115
        %v1500 = verf.f32.pop %v1116
        %v1501 = verf.f32.pop %v1117
        %v1502 = verf.f32.pop %v1118
        %v1503 = verf.f32.pop %v1119
        %v1504 = verf.f32.pop %v1120
        %v1505 = verf.f32.pop %v1121
        %v1506 = verf.f32.pop %v1122
        %v1507 = verf.f32.pop %v1123
        %v1508 = verf.f32.pop %v1124
        %v1509 = verf.f32.pop %v1125
        %v1510 = verf.f32.pop %v1126
        %v1511 = verf.f32.pop %v1127
        %v1512 = verf.f32.pop %v1128
        %v1513 = verf.f32.pop %v1129
        %v1514 = verf.f32.pop %v1130
        %v1515 = verf.f32.pop %v1131
        %v1516 = verf.f32.pop %v1132
        %v1517 = verf.f32.pop %v1133
        %v1518 = verf.f32.pop %v1134
        %v1519 = verf.f32.pop %v1135
        %v1520 = verf.f32.pop %v1136
        %v1521 = verf.f32.pop %v1137
        %v1522 = verf.f32.pop %v1138
        %v1523 = verf.f32.pop %v1139
        %v1524 = verf.f32.pop %v1140
        %v1525 = verf.f32.pop %v1141
        %v1526 = verf.f32.pop %v1142
        %v1527 = verf.f32.pop %v1143
        %v1528 = verf.f32.pop %v1144
        %v1529 = verf.f32.pop %v1145
        %v1530 = verf.f32.pop %v1146
        %v1531 = verf.f32.pop %v1147
        %v1532 = verf.f32.pop %v1148
        %v1533 = verf.f32.pop %v1149
        %v1534 = verf.f32.pop %v1150
        %v1535 = verf.f32.pop %v1151
        %v1536 = verf.f32.pop %v1152
        %v1537 = verf.f32.pop %v1153
        %v1538 = verf.f32.pop %v1154
        %v1539 = verf.f32.pop %v1155
        %v1540 = verf.f32.pop %v1156
        %v1541 = verf.f32.pop %v1157
        %v1542 = verf.f32.pop %v1158
        %v1543 = verf.f32.pop %v1159
        %v1544 = verf.f32.pop %v1160
        %v1545 = verf.f32.pop %v1161
        %v1546 = verf.f32.pop %v1162
        %v1547 = verf.f32.pop %v1163
        %v1548 = verf.f32.pop %v1164
        %v1549 = verf.f32.pop %v1165
        %v1550 = verf.f32.pop %v1166
        %v1551 = verf.f32.pop %v1167
        %v1552 = verf.f32.pop %v1168
        %v1553 = verf.f32.pop %v1169
        %v1554 = verf.f32.pop %v1170
        %v1555 = verf.f32.pop %v1171
        %v1556 = verf.f32.pop %v1172
        %v1557 = verf.f32.pop %v1173
        %v1558 = verf.f32.pop %v1174
        %v1559 = verf.f32.pop %v1175
        %v1560 = verf.f32.pop %v1176
        %v1561 = verf.f32.pop %v1177
        %v1562 = verf.f32.pop %v1178
        %v1563 = verf.f32.pop %v1179
        %v1564 = verf.f32.pop %v1180
        %v1565 = verf.f32.pop %v1181
        %v1566 = verf.f32.pop %v1182
        %v1567 = verf.f32.pop %v1183
        %v1568 = verf.f32.pop %v1184
        %v1569 = verf.f32.pop %v1185
        %v1570 = verf.f32.pop %v1186
        %v1571 = verf.f32.pop %v1187
        %v1572 = verf.f32.pop %v1188
        %v1573 = verf.f32.pop %v1189
        %v1574 = verf.f32.pop %v1190
        %v1575 = verf.f32.pop %v1191
        %v1576 = verf.f32.pop %v1192
        %v1577 = verf.f32.pop %v1193
        %v1578 = verf.f32.pop %v1194
        %v1579 = verf.f32.pop %v1195
        %v1580 = verf.f32.pop %v1196
        %v1581 = verf.f32.pop %v1197
        %v1582 = verf.f32.pop %v1198
        %v1583 = verf.f32.pop %v1199
        %v1584 = verf.f32.pop %v1200
        %v1585 = verf.f32.pop %v1201
        %v1586 = verf.f32.pop %v1202
        %v1587 = verf.f32.pop %v1203
        %v1588 = verf.f32.pop %v1204
        %v1589 = verf.f32.pop %v1205
        %v1590 = verf.f32.pop %v1206
        %v1591 = verf.f32.pop %v1207
        %v1592 = verf.f32.pop %v1208
        %v1593 = verf.f32.pop %v1209
        %v1594 = verf.f32.pop %v1210
        %v1595 = verf.f32.pop %v1211
        %v1596 = verf.f32.pop %v1212
        %v1597 = verf.f32.pop %v1213
        %v1598 = verf.f32.pop %v1214
        %v1599 = verf.f32.pop %v1215
        %v1600 = verf.f32.pop %v1216
        %v1601 = verf.f32.pop %v1217
        %v1602 = verf.f32.pop %v1218
        %v1603 = verf.f32.pop %v1219
        %v1604 = verf.f32.pop %v1220
        %v1605 = verf.f32.pop %v1221
        %v1606 = verf.f32.pop %v1222
        %v1607 = verf.f32.pop %v1223
        %v1608 = verf.f32.pop %v1224
        %v1609 = verf.f32.pop %v1225
        %v1610 = verf.f32.pop %v1226
        %v1611 = verf.f32.pop %v1227
        %v1612 = verf.f32.pop %v1228
        %v1613 = verf.f32.pop %v1229
        %v1614 = verf.f32.pop %v1230
        %v1615 = verf.f32.pop %v1231
        %v1616 = verf.f32.pop %v1232
        %v1617 = verf.f32.pop %v1233
        %v1618 = verf.f32.pop %v1234
        %v1619 = verf.f32.pop %v1235
        %v1620 = verf.f32.pop %v1236
        %v1621 = verf.f32.pop %v1237
        %v1622 = verf.f32.pop %v1238
        %v1623 = verf.f32.pop %v1239
        %v1624 = verf.f32.pop %v1240
        %v1625 = verf.f32.pop %v1241
        %v1626 = verf.f32.pop %v1242
        %v1627 = verf.f32.pop %v1243
        %v1628 = verf.f32.pop %v1244
        %v1629 = verf.f32.pop %v1245
        %v1630 = verf.f32.pop %v1246
        %v1631 = verf.f32.pop %v1247
        %v1632 = verf.f32.pop %v1248
        %v1633 = verf.f32.pop %v1249
        %v1634 = verf.f32.pop %v1250
        %v1635 = verf.f32.pop %v1251
        %v1636 = verf.f32.pop %v1252
        %v1637 = verf.f32.pop %v1253
        %v1638 = verf.f32.pop %v1254
        %v1639 = verf.f32.pop %v1255
        %v1640 = verf.f32.pop %v1256
        %v1641 = verf.f32.pop %v1257
        %v1642 = verf.f32.pop %v1258
        %v1643 = verf.f32.pop %v1259
        %v1644 = verf.f32.pop %v1260
        %v1645 = verf.f32.pop %v1261
        %v1646 = verf.f32.pop %v1262
        %v1647 = verf.f32.pop %v1263
        %v1648 = verf.f32.pop %v1264
        %v1649 = verf.f32.pop %v1265
        %v1650 = verf.f32.pop %v1266
        %v1651 = verf.f32.pop %v1267
        %v1652 = verf.f32.pop %v1268
        %v1653 = verf.f32.pop %v1269
        %v1654 = verf.f32.pop %v1270
        %v1655 = verf.f32.pop %v1271
        %v1656 = verf.f32.pop %v1272
        %v1657 = verf.f32.pop %v1273
        %v1658 = verf.f32.pop %v1274
        %v1659 = verf.f32.pop %v1275
        %v1660 = verf.f32.pop %v1276
        %v1661 = verf.f32.pop %v1277
        %v1662 = verf.f32.pop %v1278
        %v1663 = verf.f32.pop %v1279
        %v1664 = verf.f32.pop %v1280
        %v1665 = verf.f32.pop %v1281
        %v1666 = verf.f32.pop %v1282
        %v1667 = verf.f32.pop %v1283
        %v1668 = verf.f32.pop %v1284
        %v1669 = verf.f32.pop %v1285
        %v1670 = verf.f32.pop %v1286
        %v1671 = verf.f32.pop %v1287
        %v1672 = verf.f32.pop %v1288
        %v1673 = verf.f32.pop %v1289
        %v1674 = vadd.f32 %v1290, 1.0
        %v1675 = vadd.f32 %v1291, 1.0
        %v1676 = vadd.f32 %v1292, 1.0
        %v1677 = vadd.f32 %v1293, 1.0
        %v1678 = vadd.f32 %v1294, 1.0
        %v1679 = vadd.f32 %v1295, 1.0
        %v1680 = vadd.f32 %v1296, 1.0
        %v1681 = vadd.f32 %v1297, 1.0
        %v1682 = vadd.f32 %v1298, 1.0
        %v1683 = vadd.f32 %v1299, 1.0
        %v1684 = vadd.f32 %v1300, 1.0
        %v1685 = vadd.f32 %v1301, 1.0
        %v1686 = vadd.f32 %v1302, 1.0
        %v1687 = vadd.f32 %v1303, 1.0
        %v1688 = vadd.f32 %v1304, 1.0
        %v1689 = vadd.f32 %v1305, 1.0
        %v1690 = vadd.f32 %v1306, 1.0
        %v1691 = vadd.f32 %v1307, 1.0
        %v1692 = vadd.f32 %v1308, 1.0
        %v1693 = vadd.f32 %v1309, 1.0
        %v1694 = vadd.f32 %v1310, 1.0
        %v1695 = vadd.f32 %v1311, 1.0
        %v1696 = vadd.f32 %v1312, 1.0
        %v1697 = vadd.f32 %v1313, 1.0
        %v1698 = vadd.f32 %v1314, 1.0
        %v1699 = vadd.f32 %v1315, 1.0
        %v1700 = vadd.f32 %v1316, 1.0
        %v1701 = vadd.f32 %v1317, 1.0
        %v1702 = vadd.f32 %v1318, 1.0
        %v1703 = vadd.f32 %v1319, 1.0
        %v1704 = vadd.f32 %v1320, 1.0
        %v1705 = vadd.f32 %v1321, 1.0
        %v1706 = vadd.f32 %v1322, 1.0
        %v1707 = vadd.f32 %v1323, 1.0
        %v1708 = vadd.f32 %v1324, 1.0
        %v1709 = vadd.f32 %v1325, 1.0
        %v1710 = vadd.f32 %v1326, 1.0
        %v1711 = vadd.f32 %v1327, 1.0
        %v1712 = vadd.f32 %v1328, 1.0
        %v1713 = vadd.f32 %v1329, 1.0
        %v1714 = vadd.f32 %v1330, 1.0
        %v1715 = vadd.f32 %v1331, 1.0
        %v1716 = vadd.f32 %v1332, 1.0
        %v1717 = vadd.f32 %v1333, 1.0
        %v1718 = vadd.f32 %v1334, 1.0
        %v1719 = vadd.f32 %v1335, 1.0
        %v1720 = vadd.f32 %v1336, 1.0
        %v1721 = vadd.f32 %v1337, 1.0
        %v1722 = vadd.f32 %v1338, 1.0
        %v1723 = vadd.f32 %v1339, 1.0
        %v1724 = vadd.f32 %v1340, 1.0
        %v1725 = vadd.f32 %v1341, 1.0
        %v1726 = vadd.f32 %v1342, 1.0
        %v1727 = vadd.f32 %v1343, 1.0
        %v1728 = vadd.f32 %v1344, 1.0
        %v1729 = vadd.f32 %v1345, 1.0
        %v1730 = vadd.f32 %v1346, 1.0
        %v1731 = vadd.f32 %v1347, 1.0
        %v1732 = vadd.f32 %v1348, 1.0
        %v1733 = vadd.f32 %v1349, 1.0
        %v1734 = vadd.f32 %v1350, 1.0
        %v1735 = vadd.f32 %v1351, 1.0
        %v1736 = vadd.f32 %v1352, 1.0
        %v1737 = vadd.f32 %v1353, 1.0
        %v1738 = vadd.f32 %v1354, 1.0
        %v1739 = vadd.f32 %v1355, 1.0
        %v1740 = vadd.f32 %v1356, 1.0
        %v1741 = vadd.f32 %v1357, 1.0
        %v1742 = vadd.f32 %v1358, 1.0
        %v1743 = vadd.f32 %v1359, 1.0
        %v1744 = vadd.f32 %v1360, 1.0
        %v1745 = vadd.f32 %v1361, 1.0
        %v1746 = vadd.f32 %v1362, 1.0
        %v1747 = vadd.f32 %v1363, 1.0
        %v1748 = vadd.f32 %v1364, 1.0
        %v1749 = vadd.f32 %v1365, 1.0
        %v1750 = vadd.f32 %v1366, 1.0
        %v1751 = vadd.f32 %v1367, 1.0
        %v1752 = vadd.f32 %v1368, 1.0
        %v1753 = vadd.f32 %v1369, 1.0
        %v1754 = vadd.f32 %v1370, 1.0
        %v1755 = vadd.f32 %v1371, 1.0
        %v1756 = vadd.f32 %v1372, 1.0
        %v1757 = vadd.f32 %v1373, 1.0
        %v1758 = vadd.f32 %v1374, 1.0
        %v1759 = vadd.f32 %v1375, 1.0
        %v1760 = vadd.f32 %v1376, 1.0
        %v1761 = vadd.f32 %v1377, 1.0
        %v1762 = vadd.f32 %v1378, 1.0
        %v1763 = vadd.f32 %v1379, 1.0
        %v1764 = vadd.f32 %v1380, 1.0
        %v1765 = vadd.f32 %v1381, 1.0
        %v1766 = vadd.f32 %v1382, 1.0
        %v1767 = vadd.f32 %v1383, 1.0
        %v1768 = vadd.f32 %v1384, 1.0
        %v1769 = vadd.f32 %v1385, 1.0
        %v1770 = vadd.f32 %v1386, 1.0
        %v1771 = vadd.f32 %v1387, 1.0
        %v1772 = vadd.f32 %v1388, 1.0
        %v1773 = vadd.f32 %v1389, 1.0
        %v1774 = vadd.f32 %v1390, 1.0
        %v1775 = vadd.f32 %v1391, 1.0
        %v1776 = vadd.f32 %v1392, 1.0
        %v1777 = vadd.f32 %v1393, 1.0
        %v1778 = vadd.f32 %v1394, 1.0
        %v1779 = vadd.f32 %v1395, 1.0
        %v1780 = vadd.f32 %v1396, 1.0
        %v1781 = vadd.f32 %v1397, 1.0
        %v1782 = vadd.f32 %v1398, 1.0
        %v1783 = vadd.f32 %v1399, 1.0
        %v1784 = vadd.f32 %v1400, 1.0
        %v1785 = vadd.f32 %v1401, 1.0
        %v1786 = vadd.f32 %v1402, 1.0
        %v1787 = vadd.f32 %v1403, 1.0
        %v1788 = vadd.f32 %v1404, 1.0
        %v1789 = vadd.f32 %v1405, 1.0
        %v1790 = vadd.f32 %v1406, 1.0
        %v1791 = vadd.f32 %v1407, 1.0
        %v1792 = vadd.f32 %v1408, 1.0
        %v1793 = vadd.f32 %v1409, 1.0
        %v1794 = vadd.f32 %v1410, 1.0
        %v1795 = vadd.f32 %v1411, 1.0
        %v1796 = vadd.f32 %v1412, 1.0
        %v1797 = vadd.f32 %v1413, 1.0
        %v1798 = vadd.f32 %v1414, 1.0
        %v1799 = vadd.f32 %v1415, 1.0
        %v1800 = vadd.f32 %v1416, 1.0
        %v1801 = vadd.f32 %v1417, 1.0
        %v1802 = vadd.f32 %v1418, 1.0
        %v1803 = vadd.f32 %v1419, 1.0
        %v1804 = vadd.f32 %v1420, 1.0
        %v1805 = vadd.f32 %v1421, 1.0
        %v1806 = vadd.f32 %v1422, 1.0
        %v1807 = vadd.f32 %v1423, 1.0
        %v1808 = vadd.f32 %v1424, 1.0
        %v1809 = vadd.f32 %v1425, 1.0
        %v1810 = vadd.f32 %v1426, 1.0
        %v1811 = vadd.f32 %v1427, 1.0
        %v1812 = vadd.f32 %v1428, 1.0
        %v1813 = vadd.f32 %v1429, 1.0
        %v1814 = vadd.f32 %v1430, 1.0
        %v1815 = vadd.f32 %v1431, 1.0
        %v1816 = vadd.f32 %v1432, 1.0
        %v1817 = vadd.f32 %v1433, 1.0
        %v1818 = vadd.f32 %v1434, 1.0
        %v1819 = vadd.f32 %v1435, 1.0
        %v1820 = vadd.f32 %v1436, 1.0
        %v1821 = vadd.f32 %v1437, 1.0
        %v1822 = vadd.f32 %v1438, 1.0
        %v1823 = vadd.f32 %v1439, 1.0
        %v1824 = vadd.f32 %v1440, 1.0
        %v1825 = vadd.f32 %v1441, 1.0
        %v1826 = vadd.f32 %v1442, 1.0
        %v1827 = vadd.f32 %v1443, 1.0
        %v1828 = vadd.f32 %v1444, 1.0
        %v1829 = vadd.f32 %v1445, 1.0
        %v1830 = vadd.f32 %v1446, 1.0
        %v1831 = vadd.f32 %v1447, 1.0
        %v1832 = vadd.f32 %v1448, 1.0
        %v1833 = vadd.f32 %v1449, 1.0
        %v1834 = vadd.f32 %v1450, 1.0
        %v1835 = vadd.f32 %v1451, 1.0
        %v1836 = vadd.f32 %v1452, 1.0
        %v1837 = vadd.f32 %v1453, 1.0
        %v1838 = vadd.f32 %v1454, 1.0
        %v1839 = vadd.f32 %v1455, 1.0
        %v1840 = vadd.f32 %v1456, 1.0
        %v1841 = vadd.f32 %v1457, 1.0
        %v1842 = vadd.f32 %v1458, 1.0
        %v1843 = vadd.f32 %v1459, 1.0
        %v1844 = vadd.f32 %v1460, 1.0
        %v1845 = vadd.f32 %v1461, 1.0
        %v1846 = vadd.f32 %v1462, 1.0
        %v1847 = vadd.f32 %v1463, 1.0
        %v1848 = vadd.f32 %v1464, 1.0
        %v1849 = vadd.f32 %v1465, 1.0
        %v1850 = vadd.f32 %v1466, 1.0
        %v1851 = vadd.f32 %v1467, 1.0
        %v1852 = vadd.f32 %v1468, 1.0
        %v1853 = vadd.f32 %v1469, 1.0
        %v1854 = vadd.f32 %v1470, 1.0
        %v1855 = vadd.f32 %v1471, 1.0
        %v1856 = vadd.f32 %v1472, 1.0
        %v1857 = vadd.f32 %v1473, 1.0
        %v1858 = vadd.f32 %v1474, 1.0
        %v1859 = vadd.f32 %v1475, 1.0
        %v1860 = vadd.f32 %v1476, 1.0
        %v1861 = vadd.f32 %v1477, 1.0
        %v1862 = vadd.f32 %v1478, 1.0
        %v1863 = vadd.f32 %v1479, 1.0
        %v1864 = vadd.f32 %v1480, 1.0
        %v1865 = vadd.f32 %v1481, 1.0
        %v1866 = vadd.f32 %v1482, 1.0
        %v1867 = vadd.f32 %v1483, 1.0
        %v1868 = vadd.f32 %v1484, 1.0
        %v1869 = vadd.f32 %v1485, 1.0
        %v1870 = vadd.f32 %v1486, 1.0
        %v1871 = vadd.f32 %v1487, 1.0
        %v1872 = vadd.f32 %v1488, 1.0
        %v1873 = vadd.f32 %v1489, 1.0
        %v1874 = vadd.f32 %v1490, 1.0
        %v1875 = vadd.f32 %v1491, 1.0
        %v1876 = vadd.f32 %v1492, 1.0
        %v1877 = vadd.f32 %v1493, 1.0
        %v1878 = vadd.f32 %v1494, 1.0
        %v1879 = vadd.f32 %v1495, 1.0
        %v1880 = vadd.f32 %v1496, 1.0
        %v1881 = vadd.f32 %v1497, 1.0
        %v1882 = vadd.f32 %v1498, 1.0
        %v1883 = vadd.f32 %v1499, 1.0
        %v1884 = vadd.f32 %v1500, 1.0
        %v1885 = vadd.f32 %v1501, 1.0
        %v1886 = vadd.f32 %v1502, 1.0
        %v1887 = vadd.f32 %v1503, 1.0
        %v1888 = vadd.f32 %v1504, 1.0
        %v1889 = vadd.f32 %v1505, 1.0
        %v1890 = vadd.f32 %v1506, 1.0
        %v1891 = vadd.f32 %v1507, 1.0
        %v1892 = vadd.f32 %v1508, 1.0
        %v1893 = vadd.f32 %v1509, 1.0
        %v1894 = vadd.f32 %v1510, 1.0
        %v1895 = vadd.f32 %v1511, 1.0
        %v1896 = vadd.f32 %v1512, 1.0
        %v1897 = vadd.f32 %v1513, 1.0
        %v1898 = vadd.f32 %v1514, 1.0
        %v1899 = vadd.f32 %v1515, 1.0
        %v1900 = vadd.f32 %v1516, 1.0
        %v1901 = vadd.f32 %v1517, 1.0
        %v1902 = vadd.f32 %v1518, 1.0
        %v1903 = vadd.f32 %v1519, 1.0
        %v1904 = vadd.f32 %v1520, 1.0
        %v1905 = vadd.f32 %v1521, 1.0
        %v1906 = vadd.f32 %v1522, 1.0
        %v1907 = vadd.f32 %v1523, 1.0
        %v1908 = vadd.f32 %v1524, 1.0
        %v1909 = vadd.f32 %v1525, 1.0
        %v1910 = vadd.f32 %v1526, 1.0
        %v1911 = vadd.f32 %v1527, 1.0
        %v1912 = vadd.f32 %v1528, 1.0
        %v1913 = vadd.f32 %v1529, 1.0
        %v1914 = vadd.f32 %v1530, 1.0
        %v1915 = vadd.f32 %v1531, 1.0
        %v1916 = vadd.f32 %v1532, 1.0
        %v1917 = vadd.f32 %v1533, 1.0
        %v1918 = vadd.f32 %v1534, 1.0
        %v1919 = vadd.f32 %v1535, 1.0
        %v1920 = vadd.f32 %v1536, 1.0
        %v1921 = vadd.f32 %v1537, 1.0
        %v1922 = vadd.f32 %v1538, 1.0
        %v1923 = vadd.f32 %v1539, 1.0
        %v1924 = vadd.f32 %v1540, 1.0
        %v1925 = vadd.f32 %v1541, 1.0
        %v1926 = vadd.f32 %v1542, 1.0
        %v1927 = vadd.f32 %v1543, 1.0
        %v1928 = vadd.f32 %v1544, 1.0
        %v1929 = vadd.f32 %v1545, 1.0
        %v1930 = vadd.f32 %v1546, 1.0
        %v1931 = vadd.f32 %v1547, 1.0
        %v1932 = vadd.f32 %v1548, 1.0
        %v1933 = vadd.f32 %v1549, 1.0
        %v1934 = vadd.f32 %v1550, 1.0
        %v1935 = vadd.f32 %v1551, 1.0
        %v1936 = vadd.f32 %v1552, 1.0
        %v1937 = vadd.f32 %v1553, 1.0
        %v1938 = vadd.f32 %v1554, 1.0
        %v1939 = vadd.f32 %v1555, 1.0
        %v1940 = vadd.f32 %v1556, 1.0
        %v1941 = vadd.f32 %v1557, 1.0
        %v1942 = vadd.f32 %v1558, 1.0
        %v1943 = vadd.f32 %v1559, 1.0
        %v1944 = vadd.f32 %v1560, 1.0
        %v1945 = vadd.f32 %v1561, 1.0
        %v1946 = vadd.f32 %v1562, 1.0
        %v1947 = vadd.f32 %v1563, 1.0
        %v1948 = vadd.f32 %v1564, 1.0
        %v1949 = vadd.f32 %v1565, 1.0
        %v1950 = vadd.f32 %v1566, 1.0
        %v1951 = vadd.f32 %v1567, 1.0
        %v1952 = vadd.f32 %v1568, 1.0
        %v1953 = vadd.f32 %v1569, 1.0
        %v1954 = vadd.f32 %v1570, 1.0
        %v1955 = vadd.f32 %v1571, 1.0
        %v1956 = vadd.f32 %v1572, 1.0
        %v1957 = vadd.f32 %v1573, 1.0
        %v1958 = vadd.f32 %v1574, 1.0
        %v1959 = vadd.f32 %v1575, 1.0
        %v1960 = vadd.f32 %v1576, 1.0
        %v1961 = vadd.f32 %v1577, 1.0
        %v1962 = vadd.f32 %v1578, 1.0
        %v1963 = vadd.f32 %v1579, 1.0
        %v1964 = vadd.f32 %v1580, 1.0
        %v1965 = vadd.f32 %v1581, 1.0
        %v1966 = vadd.f32 %v1582, 1.0
        %v1967 = vadd.f32 %v1583, 1.0
        %v1968 = vadd.f32 %v1584, 1.0
        %v1969 = vadd.f32 %v1585, 1.0
        %v1970 = vadd.f32 %v1586, 1.0
        %v1971 = vadd.f32 %v1587, 1.0
        %v1972 = vadd.f32 %v1588, 1.0
        %v1973 = vadd.f32 %v1589, 1.0
        %v1974 = vadd.f32 %v1590, 1.0
        %v1975 = vadd.f32 %v1591, 1.0
        %v1976 = vadd.f32 %v1592, 1.0
        %v1977 = vadd.f32 %v1593, 1.0
        %v1978 = vadd.f32 %v1594, 1.0
        %v1979 = vadd.f32 %v1595, 1.0
        %v1980 = vadd.f32 %v1596, 1.0
        %v1981 = vadd.f32 %v1597, 1.0
        %v1982 = vadd.f32 %v1598, 1.0
        %v1983 = vadd.f32 %v1599, 1.0
        %v1984 = vadd.f32 %v1600, 1.0
        %v1985 = vadd.f32 %v1601, 1.0
        %v1986 = vadd.f32 %v1602, 1.0
        %v1987 = vadd.f32 %v1603, 1.0
        %v1988 = vadd.f32 %v1604, 1.0
        %v1989 = vadd.f32 %v1605, 1.0
        %v1990 = vadd.f32 %v1606, 1.0
        %v1991 = vadd.f32 %v1607, 1.0
        %v1992 = vadd.f32 %v1608, 1.0
        %v1993 = vadd.f32 %v1609, 1.0
        %v1994 = vadd.f32 %v1610, 1.0
        %v1995 = vadd.f32 %v1611, 1.0
        %v1996 = vadd.f32 %v1612, 1.0
        %v1997 = vadd.f32 %v1613, 1.0
        %v1998 = vadd.f32 %v1614, 1.0
        %v1999 = vadd.f32 %v1615, 1.0
        %v2000 = vadd.f32 %v1616, 1.0
        %v2001 = vadd.f32 %v1617, 1.0
        %v2002 = vadd.f32 %v1618, 1.0
        %v2003 = vadd.f32 %v1619, 1.0
        %v2004 = vadd.f32 %v1620, 1.0
        %v2005 = vadd.f32 %v1621, 1.0
        %v2006 = vadd.f32 %v1622, 1.0
        %v2007 = vadd.f32 %v1623, 1.0
        %v2008 = vadd.f32 %v1624, 1.0
        %v2009 = vadd.f32 %v1625, 1.0
        %v2010 = vadd.f32 %v1626, 1.0
        %v2011 = vadd.f32 %v1627, 1.0
        %v2012 = vadd.f32 %v1628, 1.0
        %v2013 = vadd.f32 %v1629, 1.0
        %v2014 = vadd.f32 %v1630, 1.0
        %v2015 = vadd.f32 %v1631, 1.0
        %v2016 = vadd.f32 %v1632, 1.0
        %v2017 = vadd.f32 %v1633, 1.0
        %v2018 = vadd.f32 %v1634, 1.0
        %v2019 = vadd.f32 %v1635, 1.0
        %v2020 = vadd.f32 %v1636, 1.0
        %v2021 = vadd.f32 %v1637, 1.0
        %v2022 = vadd.f32 %v1638, 1.0
        %v2023 = vadd.f32 %v1639, 1.0
        %v2024 = vadd.f32 %v1640, 1.0
        %v2025 = vadd.f32 %v1641, 1.0
        %v2026 = vadd.f32 %v1642, 1.0
        %v2027 = vadd.f32 %v1643, 1.0
        %v2028 = vadd.f32 %v1644, 1.0
        %v2029 = vadd.f32 %v1645, 1.0
        %v2030 = vadd.f32 %v1646, 1.0
        %v2031 = vadd.f32 %v1647, 1.0
        %v2032 = vadd.f32 %v1648, 1.0
        %v2033 = vadd.f32 %v1649, 1.0
        %v2034 = vadd.f32 %v1650, 1.0
        %v2035 = vadd.f32 %v1651, 1.0
        %v2036 = vadd.f32 %v1652, 1.0
        %v2037 = vadd.f32 %v1653, 1.0
        %v2038 = vadd.f32 %v1654, 1.0
        %v2039 = vadd.f32 %v1655, 1.0
        %v2040 = vadd.f32 %v1656, 1.0
        %v2041 = vadd.f32 %v1657, 1.0
        %v2042 = vadd.f32 %v1658, 1.0
        %v2043 = vadd.f32 %v1659, 1.0
        %v2044 = vadd.f32 %v1660, 1.0
        %v2045 = vadd.f32 %v1661, 1.0
        %v2046 = vadd.f32 %v1662, 1.0
        %v2047 = vadd.f32 %v1663, 1.0
        %v2048 = vadd.f32 %v1664, 1.0
        %v2049 = vadd.f32 %v1665, 1.0
        %v2050 = vadd.f32 %v1666, 1.0
        %v2051 = vadd.f32 %v1667, 1.0
        %v2052 = vadd.f32 %v1668, 1.0
        %v2053 = vadd.f32 %v1669, 1.0
        %v2054 = vadd.f32 %v1670, 1.0
        %v2055 = vadd.f32 %v1671, 1.0
        %v2056 = vadd.f32 %v1672, 1.0
        %v2057 = vadd.f32 %v1673, 1.0
        %v2058 = vmul.f32 %v522, %v1674
        %v2059 = vmul.f32 %v523, %v1675
        %v2060 = vmul.f32 %v524, %v1676
        %v2061 = vmul.f32 %v525, %v1677
        %v2062 = vmul.f32 %v526, %v1678
        %v2063 = vmul.f32 %v527, %v1679
        %v2064 = vmul.f32 %v528, %v1680
        %v2065 = vmul.f32 %v529, %v1681
        %v2066 = vmul.f32 %v530, %v1682
        %v2067 = vmul.f32 %v531, %v1683
        %v2068 = vmul.f32 %v532, %v1684
        %v2069 = vmul.f32 %v533, %v1685
        %v2070 = vmul.f32 %v534, %v1686
        %v2071 = vmul.f32 %v535, %v1687
        %v2072 = vmul.f32 %v536, %v1688
        %v2073 = vmul.f32 %v537, %v1689
        %v2074 = vmul.f32 %v538, %v1690
        %v2075 = vmul.f32 %v539, %v1691
        %v2076 = vmul.f32 %v540, %v1692
        %v2077 = vmul.f32 %v541, %v1693
        %v2078 = vmul.f32 %v542, %v1694
        %v2079 = vmul.f32 %v543, %v1695
        %v2080 = vmul.f32 %v544, %v1696
        %v2081 = vmul.f32 %v545, %v1697
        %v2082 = vmul.f32 %v546, %v1698
        %v2083 = vmul.f32 %v547, %v1699
        %v2084 = vmul.f32 %v548, %v1700
        %v2085 = vmul.f32 %v549, %v1701
        %v2086 = vmul.f32 %v550, %v1702
        %v2087 = vmul.f32 %v551, %v1703
        %v2088 = vmul.f32 %v552, %v1704
        %v2089 = vmul.f32 %v553, %v1705
        %v2090 = vmul.f32 %v554, %v1706
        %v2091 = vmul.f32 %v555, %v1707
        %v2092 = vmul.f32 %v556, %v1708
        %v2093 = vmul.f32 %v557, %v1709
        %v2094 = vmul.f32 %v558, %v1710
        %v2095 = vmul.f32 %v559, %v1711
        %v2096 = vmul.f32 %v560, %v1712
        %v2097 = vmul.f32 %v561, %v1713
        %v2098 = vmul.f32 %v562, %v1714
        %v2099 = vmul.f32 %v563, %v1715
        %v2100 = vmul.f32 %v564, %v1716
        %v2101 = vmul.f32 %v565, %v1717
        %v2102 = vmul.f32 %v566, %v1718
        %v2103 = vmul.f32 %v567, %v1719
        %v2104 = vmul.f32 %v568, %v1720
        %v2105 = vmul.f32 %v569, %v1721
        %v2106 = vmul.f32 %v570, %v1722
        %v2107 = vmul.f32 %v571, %v1723
        %v2108 = vmul.f32 %v572, %v1724
        %v2109 = vmul.f32 %v573, %v1725
        %v2110 = vmul.f32 %v574, %v1726
        %v2111 = vmul.f32 %v575, %v1727
        %v2112 = vmul.f32 %v576, %v1728
        %v2113 = vmul.f32 %v577, %v1729
        %v2114 = vmul.f32 %v578, %v1730
        %v2115 = vmul.f32 %v579, %v1731
        %v2116 = vmul.f32 %v580, %v1732
        %v2117 = vmul.f32 %v581, %v1733
        %v2118 = vmul.f32 %v582, %v1734
        %v2119 = vmul.f32 %v583, %v1735
        %v2120 = vmul.f32 %v584, %v1736
        %v2121 = vmul.f32 %v585, %v1737
        %v2122 = vmul.f32 %v586, %v1738
        %v2123 = vmul.f32 %v587, %v1739
        %v2124 = vmul.f32 %v588, %v1740
        %v2125 = vmul.f32 %v589, %v1741
        %v2126 = vmul.f32 %v590, %v1742
        %v2127 = vmul.f32 %v591, %v1743
        %v2128 = vmul.f32 %v592, %v1744
        %v2129 = vmul.f32 %v593, %v1745
        %v2130 = vmul.f32 %v594, %v1746
        %v2131 = vmul.f32 %v595, %v1747
        %v2132 = vmul.f32 %v596, %v1748
        %v2133 = vmul.f32 %v597, %v1749
        %v2134 = vmul.f32 %v598, %v1750
        %v2135 = vmul.f32 %v599, %v1751
        %v2136 = vmul.f32 %v600, %v1752
        %v2137 = vmul.f32 %v601, %v1753
        %v2138 = vmul.f32 %v602, %v1754
        %v2139 = vmul.f32 %v603, %v1755
        %v2140 = vmul.f32 %v604, %v1756
        %v2141 = vmul.f32 %v605, %v1757
        %v2142 = vmul.f32 %v606, %v1758
        %v2143 = vmul.f32 %v607, %v1759
        %v2144 = vmul.f32 %v608, %v1760
        %v2145 = vmul.f32 %v609, %v1761
        %v2146 = vmul.f32 %v610, %v1762
        %v2147 = vmul.f32 %v611, %v1763
        %v2148 = vmul.f32 %v612, %v1764
        %v2149 = vmul.f32 %v613, %v1765
        %v2150 = vmul.f32 %v614, %v1766
        %v2151 = vmul.f32 %v615, %v1767
        %v2152 = vmul.f32 %v616, %v1768
        %v2153 = vmul.f32 %v617, %v1769
        %v2154 = vmul.f32 %v618, %v1770
        %v2155 = vmul.f32 %v619, %v1771
        %v2156 = vmul.f32 %v620, %v1772
        %v2157 = vmul.f32 %v621, %v1773
        %v2158 = vmul.f32 %v622, %v1774
        %v2159 = vmul.f32 %v623, %v1775
        %v2160 = vmul.f32 %v624, %v1776
        %v2161 = vmul.f32 %v625, %v1777
        %v2162 = vmul.f32 %v626, %v1778
        %v2163 = vmul.f32 %v627, %v1779
        %v2164 = vmul.f32 %v628, %v1780
        %v2165 = vmul.f32 %v629, %v1781
        %v2166 = vmul.f32 %v630, %v1782
        %v2167 = vmul.f32 %v631, %v1783
        %v2168 = vmul.f32 %v632, %v1784
        %v2169 = vmul.f32 %v633, %v1785
        %v2170 = vmul.f32 %v634, %v1786
        %v2171 = vmul.f32 %v635, %v1787
        %v2172 = vmul.f32 %v636, %v1788
        %v2173 = vmul.f32 %v637, %v1789
        %v2174 = vmul.f32 %v638, %v1790
        %v2175 = vmul.f32 %v639, %v1791
        %v2176 = vmul.f32 %v640, %v1792
        %v2177 = vmul.f32 %v641, %v1793
        %v2178 = vmul.f32 %v642, %v1794
        %v2179 = vmul.f32 %v643, %v1795
        %v2180 = vmul.f32 %v644, %v1796
        %v2181 = vmul.f32 %v645, %v1797
        %v2182 = vmul.f32 %v646, %v1798
        %v2183 = vmul.f32 %v647, %v1799
        %v2184 = vmul.f32 %v648, %v1800
        %v2185 = vmul.f32 %v649, %v1801
        %v2186 = vmul.f32 %v650, %v1802
        %v2187 = vmul.f32 %v651, %v1803
        %v2188 = vmul.f32 %v652, %v1804
        %v2189 = vmul.f32 %v653, %v1805
        %v2190 = vmul.f32 %v654, %v1806
        %v2191 = vmul.f32 %v655, %v1807
        %v2192 = vmul.f32 %v656, %v1808
        %v2193 = vmul.f32 %v657, %v1809
        %v2194 = vmul.f32 %v658, %v1810
        %v2195 = vmul.f32 %v659, %v1811
        %v2196 = vmul.f32 %v660, %v1812
        %v2197 = vmul.f32 %v661, %v1813
        %v2198 = vmul.f32 %v662, %v1814
        %v2199 = vmul.f32 %v663, %v1815
        %v2200 = vmul.f32 %v664, %v1816
        %v2201 = vmul.f32 %v665, %v1817
        %v2202 = vmul.f32 %v666, %v1818
        %v2203 = vmul.f32 %v667, %v1819
        %v2204 = vmul.f32 %v668, %v1820
        %v2205 = vmul.f32 %v669, %v1821
        %v2206 = vmul.f32 %v670, %v1822
        %v2207 = vmul.f32 %v671, %v1823
        %v2208 = vmul.f32 %v672, %v1824
        %v2209 = vmul.f32 %v673, %v1825
        %v2210 = vmul.f32 %v674, %v1826
        %v2211 = vmul.f32 %v675, %v1827
        %v2212 = vmul.f32 %v676, %v1828
        %v2213 = vmul.f32 %v677, %v1829
        %v2214 = vmul.f32 %v678, %v1830
        %v2215 = vmul.f32 %v679, %v1831
        %v2216 = vmul.f32 %v680, %v1832
        %v2217 = vmul.f32 %v681, %v1833
        %v2218 = vmul.f32 %v682, %v1834
        %v2219 = vmul.f32 %v683, %v1835
        %v2220 = vmul.f32 %v684, %v1836
        %v2221 = vmul.f32 %v685, %v1837
        %v2222 = vmul.f32 %v686, %v1838
        %v2223 = vmul.f32 %v687, %v1839
        %v2224 = vmul.f32 %v688, %v1840
        %v2225 = vmul.f32 %v689, %v1841
        %v2226 = vmul.f32 %v690, %v1842
        %v2227 = vmul.f32 %v691, %v1843
        %v2228 = vmul.f32 %v692, %v1844
        %v2229 = vmul.f32 %v693, %v1845
        %v2230 = vmul.f32 %v694, %v1846
        %v2231 = vmul.f32 %v695, %v1847
        %v2232 = vmul.f32 %v696, %v1848
        %v2233 = vmul.f32 %v697, %v1849
        %v2234 = vmul.f32 %v698, %v1850
        %v2235 = vmul.f32 %v699, %v1851
        %v2236 = vmul.f32 %v700, %v1852
        %v2237 = vmul.f32 %v701, %v1853
        %v2238 = vmul.f32 %v702, %v1854
        %v2239 = vmul.f32 %v703, %v1855
        %v2240 = vmul.f32 %v704, %v1856
        %v2241 = vmul.f32 %v705, %v1857
        %v2242 = vmul.f32 %v706, %v1858
        %v2243 = vmul.f32 %v707, %v1859
        %v2244 = vmul.f32 %v708, %v1860
        %v2245 = vmul.f32 %v709, %v1861
        %v2246 = vmul.f32 %v710, %v1862
        %v2247 = vmul.f32 %v711, %v1863
        %v2248 = vmul.f32 %v712, %v1864
        %v2249 = vmul.f32 %v713, %v1865
        %v2250 = vmul.f32 %v714, %v1866
        %v2251 = vmul.f32 %v715, %v1867
        %v2252 = vmul.f32 %v716, %v1868
        %v2253 = vmul.f32 %v717, %v1869
        %v2254 = vmul.f32 %v718, %v1870
        %v2255 = vmul.f32 %v719, %v1871
        %v2256 = vmul.f32 %v720, %v1872
        %v2257 = vmul.f32 %v721, %v1873
        %v2258 = vmul.f32 %v722, %v1874
        %v2259 = vmul.f32 %v723, %v1875
        %v2260 = vmul.f32 %v724, %v1876
        %v2261 = vmul.f32 %v725, %v1877
        %v2262 = vmul.f32 %v726, %v1878
        %v2263 = vmul.f32 %v727, %v1879
        %v2264 = vmul.f32 %v728, %v1880
        %v2265 = vmul.f32 %v729, %v1881
        %v2266 = vmul.f32 %v730, %v1882
        %v2267 = vmul.f32 %v731, %v1883
        %v2268 = vmul.f32 %v732, %v1884
        %v2269 = vmul.f32 %v733, %v1885
        %v2270 = vmul.f32 %v734, %v1886
        %v2271 = vmul.f32 %v735, %v1887
        %v2272 = vmul.f32 %v736, %v1888
        %v2273 = vmul.f32 %v737, %v1889
        %v2274 = vmul.f32 %v738, %v1890
        %v2275 = vmul.f32 %v739, %v1891
        %v2276 = vmul.f32 %v740, %v1892
        %v2277 = vmul.f32 %v741, %v1893
        %v2278 = vmul.f32 %v742, %v1894
        %v2279 = vmul.f32 %v743, %v1895
        %v2280 = vmul.f32 %v744, %v1896
        %v2281 = vmul.f32 %v745, %v1897
        %v2282 = vmul.f32 %v746, %v1898
        %v2283 = vmul.f32 %v747, %v1899
        %v2284 = vmul.f32 %v748, %v1900
        %v2285 = vmul.f32 %v749, %v1901
        %v2286 = vmul.f32 %v750, %v1902
        %v2287 = vmul.f32 %v751, %v1903
        %v2288 = vmul.f32 %v752, %v1904
        %v2289 = vmul.f32 %v753, %v1905
        %v2290 = vmul.f32 %v754, %v1906
        %v2291 = vmul.f32 %v755, %v1907
        %v2292 = vmul.f32 %v756, %v1908
        %v2293 = vmul.f32 %v757, %v1909
        %v2294 = vmul.f32 %v758, %v1910
        %v2295 = vmul.f32 %v759, %v1911
        %v2296 = vmul.f32 %v760, %v1912
        %v2297 = vmul.f32 %v761, %v1913
        %v2298 = vmul.f32 %v762, %v1914
        %v2299 = vmul.f32 %v763, %v1915
        %v2300 = vmul.f32 %v764, %v1916
        %v2301 = vmul.f32 %v765, %v1917
        %v2302 = vmul.f32 %v766, %v1918
        %v2303 = vmul.f32 %v767, %v1919
        %v2304 = vmul.f32 %v768, %v1920
        %v2305 = vmul.f32 %v769, %v1921
        %v2306 = vmul.f32 %v770, %v1922
        %v2307 = vmul.f32 %v771, %v1923
        %v2308 = vmul.f32 %v772, %v1924
        %v2309 = vmul.f32 %v773, %v1925
        %v2310 = vmul.f32 %v774, %v1926
        %v2311 = vmul.f32 %v775, %v1927
        %v2312 = vmul.f32 %v776, %v1928
        %v2313 = vmul.f32 %v777, %v1929
        %v2314 = vmul.f32 %v778, %v1930
        %v2315 = vmul.f32 %v779, %v1931
        %v2316 = vmul.f32 %v780, %v1932
        %v2317 = vmul.f32 %v781, %v1933
        %v2318 = vmul.f32 %v782, %v1934
        %v2319 = vmul.f32 %v783, %v1935
        %v2320 = vmul.f32 %v784, %v1936
        %v2321 = vmul.f32 %v785, %v1937
        %v2322 = vmul.f32 %v786, %v1938
        %v2323 = vmul.f32 %v787, %v1939
        %v2324 = vmul.f32 %v788, %v1940
        %v2325 = vmul.f32 %v789, %v1941
        %v2326 = vmul.f32 %v790, %v1942
        %v2327 = vmul.f32 %v791, %v1943
        %v2328 = vmul.f32 %v792, %v1944
        %v2329 = vmul.f32 %v793, %v1945
        %v2330 = vmul.f32 %v794, %v1946
        %v2331 = vmul.f32 %v795, %v1947
        %v2332 = vmul.f32 %v796, %v1948
        %v2333 = vmul.f32 %v797, %v1949
        %v2334 = vmul.f32 %v798, %v1950
        %v2335 = vmul.f32 %v799, %v1951
        %v2336 = vmul.f32 %v800, %v1952
        %v2337 = vmul.f32 %v801, %v1953
        %v2338 = vmul.f32 %v802, %v1954
        %v2339 = vmul.f32 %v803, %v1955
        %v2340 = vmul.f32 %v804, %v1956
        %v2341 = vmul.f32 %v805, %v1957
        %v2342 = vmul.f32 %v806, %v1958
        %v2343 = vmul.f32 %v807, %v1959
        %v2344 = vmul.f32 %v808, %v1960
        %v2345 = vmul.f32 %v809, %v1961
        %v2346 = vmul.f32 %v810, %v1962
        %v2347 = vmul.f32 %v811, %v1963
        %v2348 = vmul.f32 %v812, %v1964
        %v2349 = vmul.f32 %v813, %v1965
        %v2350 = vmul.f32 %v814, %v1966
        %v2351 = vmul.f32 %v815, %v1967
        %v2352 = vmul.f32 %v816, %v1968
        %v2353 = vmul.f32 %v817, %v1969
        %v2354 = vmul.f32 %v818, %v1970
        %v2355 = vmul.f32 %v819, %v1971
        %v2356 = vmul.f32 %v820, %v1972
        %v2357 = vmul.f32 %v821, %v1973
        %v2358 = vmul.f32 %v822, %v1974
        %v2359 = vmul.f32 %v823, %v1975
        %v2360 = vmul.f32 %v824, %v1976
        %v2361 = vmul.f32 %v825, %v1977
        %v2362 = vmul.f32 %v826, %v1978
        %v2363 = vmul.f32 %v827, %v1979
        %v2364 = vmul.f32 %v828, %v1980
        %v2365 = vmul.f32 %v829, %v1981
        %v2366 = vmul.f32 %v830, %v1982
        %v2367 = vmul.f32 %v831, %v1983
        %v2368 = vmul.f32 %v832, %v1984
        %v2369 = vmul.f32 %v833, %v1985
        %v2370 = vmul.f32 %v834, %v1986
        %v2371 = vmul.f32 %v835, %v1987
        %v2372 = vmul.f32 %v836, %v1988
        %v2373 = vmul.f32 %v837, %v1989
        %v2374 = vmul.f32 %v838, %v1990
        %v2375 = vmul.f32 %v839, %v1991
        %v2376 = vmul.f32 %v840, %v1992
        %v2377 = vmul.f32 %v841, %v1993
        %v2378 = vmul.f32 %v842, %v1994
        %v2379 = vmul.f32 %v843, %v1995
        %v2380 = vmul.f32 %v844, %v1996
        %v2381 = vmul.f32 %v845, %v1997
        %v2382 = vmul.f32 %v846, %v1998
        %v2383 = vmul.f32 %v847, %v1999
        %v2384 = vmul.f32 %v848, %v2000
        %v2385 = vmul.f32 %v849, %v2001
        %v2386 = vmul.f32 %v850, %v2002
        %v2387 = vmul.f32 %v851, %v2003
        %v2388 = vmul.f32 %v852, %v2004
        %v2389 = vmul.f32 %v853, %v2005
        %v2390 = vmul.f32 %v854, %v2006
        %v2391 = vmul.f32 %v855, %v2007
        %v2392 = vmul.f32 %v856, %v2008
        %v2393 = vmul.f32 %v857, %v2009
        %v2394 = vmul.f32 %v858, %v2010
        %v2395 = vmul.f32 %v859, %v2011
        %v2396 = vmul.f32 %v860, %v2012
        %v2397 = vmul.f32 %v861, %v2013
        %v2398 = vmul.f32 %v862, %v2014
        %v2399 = vmul.f32 %v863, %v2015
        %v2400 = vmul.f32 %v864, %v2016
        %v2401 = vmul.f32 %v865, %v2017
        %v2402 = vmul.f32 %v866, %v2018
        %v2403 = vmul.f32 %v867, %v2019
        %v2404 = vmul.f32 %v868, %v2020
        %v2405 = vmul.f32 %v869, %v2021
        %v2406 = vmul.f32 %v870, %v2022
        %v2407 = vmul.f32 %v871, %v2023
        %v2408 = vmul.f32 %v872, %v2024
        %v2409 = vmul.f32 %v873, %v2025
        %v2410 = vmul.f32 %v874, %v2026
        %v2411 = vmul.f32 %v875, %v2027
        %v2412 = vmul.f32 %v876, %v2028
        %v2413 = vmul.f32 %v877, %v2029
        %v2414 = vmul.f32 %v878, %v2030
        %v2415 = vmul.f32 %v879, %v2031
        %v2416 = vmul.f32 %v880, %v2032
        %v2417 = vmul.f32 %v881, %v2033
        %v2418 = vmul.f32 %v882, %v2034
        %v2419 = vmul.f32 %v883, %v2035
        %v2420 = vmul.f32 %v884, %v2036
        %v2421 = vmul.f32 %v885, %v2037
        %v2422 = vmul.f32 %v886, %v2038
        %v2423 = vmul.f32 %v887, %v2039
        %v2424 = vmul.f32 %v888, %v2040
        %v2425 = vmul.f32 %v889, %v2041
        %v2426 = vmul.f32 %v890, %v2042
        %v2427 = vmul.f32 %v891, %v2043
        %v2428 = vmul.f32 %v892, %v2044
        %v2429 = vmul.f32 %v893, %v2045
        %v2430 = vmul.f32 %v894, %v2046
        %v2431 = vmul.f32 %v895, %v2047
        %v2432 = vmul.f32 %v896, %v2048
        %v2433 = vmul.f32 %v897, %v2049
        %v2434 = vmul.f32 %v898, %v2050
        %v2435 = vmul.f32 %v899, %v2051
        %v2436 = vmul.f32 %v900, %v2052
        %v2437 = vmul.f32 %v901, %v2053
        %v2438 = vmul.f32 %v902, %v2054
        %v2439 = vmul.f32 %v903, %v2055
        %v2440 = vmul.f32 %v904, %v2056
        %v2441 = vmul.f32 %v905, %v2057
        %2442 = vst [vmem:[%s135] sm:$0xff] %v2058
        %2443 = vst [vmem:[%s135 + $0x8] sm:$0xff] %v2059
        %2444 = vst [vmem:[%s135 + $0x10] sm:$0xff] %v2060
        %2445 = vst [vmem:[%s135 + $0x18] sm:$0xff] %v2061
        %2446 = vst [vmem:[%s135 + $0x20] sm:$0xff] %v2062
        %2447 = vst [vmem:[%s135 + $0x28] sm:$0xff] %v2063
        %2448 = vst [vmem:[%s135 + $0x30] sm:$0xff] %v2064
        %2449 = vst [vmem:[%s135 + $0x38] sm:$0xff] %v2065
        %2450 = vst [vmem:[%s135 + $0x40] sm:$0xff] %v2066
        %2451 = vst [vmem:[%s135 + $0x48] sm:$0xff] %v2067
        %2452 = vst [vmem:[%s135 + $0x50] sm:$0xff] %v2068
        %2453 = vst [vmem:[%s135 + $0x58] sm:$0xff] %v2069
        %2454 = vst [vmem:[%s135 + $0x60] sm:$0xff] %v2070
        %2455 = vst [vmem:[%s135 + $0x68] sm:$0xff] %v2071
        %2456 = vst [vmem:[%s135 + $0x70] sm:$0xff] %v2072
        %2457 = vst [vmem:[%s135 + $0x78] sm:$0xff] %v2073
        %2458 = vst [vmem:[%s135 + $0x80] sm:$0xff] %v2074
        %2459 = vst [vmem:[%s135 + $0x88] sm:$0xff] %v2075
        %2460 = vst [vmem:[%s135 + $0x90] sm:$0xff] %v2076
        %2461 = vst [vmem:[%s135 + $0x98] sm:$0xff] %v2077
        %2462 = vst [vmem:[%s135 + $0xa0] sm:$0xff] %v2078
        %2463 = vst [vmem:[%s135 + $0xa8] sm:$0xff] %v2079
        %2464 = vst [vmem:[%s135 + $0xb0] sm:$0xff] %v2080
        %2465 = vst [vmem:[%s135 + $0xb8] sm:$0xff] %v2081
        %2466 = vst [vmem:[%s135 + $0xc0] sm:$0xff] %v2082
        %2467 = vst [vmem:[%s135 + $0xc8] sm:$0xff] %v2083
        %2468 = vst [vmem:[%s135 + $0xd0] sm:$0xff] %v2084
        %2469 = vst [vmem:[%s135 + $0xd8] sm:$0xff] %v2085
        %2470 = vst [vmem:[%s135 + $0xe0] sm:$0xff] %v2086
        %2471 = vst [vmem:[%s135 + $0xe8] sm:$0xff] %v2087
        %2472 = vst [vmem:[%s135 + $0xf0] sm:$0xff] %v2088
        %2473 = vst [vmem:[%s135 + $0xf8] sm:$0xff] %v2089
        %2474 = vst [vmem:[%s135 + $0x100] sm:$0xff] %v2090
        %2475 = vst [vmem:[%s135 + $0x108] sm:$0xff] %v2091
        %2476 = vst [vmem:[%s135 + $0x110] sm:$0xff] %v2092
        %2477 = vst [vmem:[%s135 + $0x118] sm:$0xff] %v2093
        %2478 = vst [vmem:[%s135 + $0x120] sm:$0xff] %v2094
        %2479 = vst [vmem:[%s135 + $0x128] sm:$0xff] %v2095
        %2480 = vst [vmem:[%s135 + $0x130] sm:$0xff] %v2096
        %2481 = vst [vmem:[%s135 + $0x138] sm:$0xff] %v2097
        %2482 = vst [vmem:[%s135 + $0x140] sm:$0xff] %v2098
        %2483 = vst [vmem:[%s135 + $0x148] sm:$0xff] %v2099
        %2484 = vst [vmem:[%s135 + $0x150] sm:$0xff] %v2100
        %2485 = vst [vmem:[%s135 + $0x158] sm:$0xff] %v2101
        %2486 = vst [vmem:[%s135 + $0x160] sm:$0xff] %v2102
        %2487 = vst [vmem:[%s135 + $0x168] sm:$0xff] %v2103
        %2488 = vst [vmem:[%s135 + $0x170] sm:$0xff] %v2104
        %2489 = vst [vmem:[%s135 + $0x178] sm:$0xff] %v2105
        %2490 = vst [vmem:[%s135 + $0x180] sm:$0xff] %v2106
        %2491 = vst [vmem:[%s135 + $0x188] sm:$0xff] %v2107
        %2492 = vst [vmem:[%s135 + $0x190] sm:$0xff] %v2108
        %2493 = vst [vmem:[%s135 + $0x198] sm:$0xff] %v2109
        %2494 = vst [vmem:[%s135 + $0x1a0] sm:$0xff] %v2110
        %2495 = vst [vmem:[%s135 + $0x1a8] sm:$0xff] %v2111
        %2496 = vst [vmem:[%s135 + $0x1b0] sm:$0xff] %v2112
        %2497 = vst [vmem:[%s135 + $0x1b8] sm:$0xff] %v2113
        %2498 = vst [vmem:[%s135 + $0x1c0] sm:$0xff] %v2114
        %2499 = vst [vmem:[%s135 + $0x1c8] sm:$0xff] %v2115
        %2500 = vst [vmem:[%s135 + $0x1d0] sm:$0xff] %v2116
        %2501 = vst [vmem:[%s135 + $0x1d8] sm:$0xff] %v2117
        %2502 = vst [vmem:[%s135 + $0x1e0] sm:$0xff] %v2118
        %2503 = vst [vmem:[%s135 + $0x1e8] sm:$0xff] %v2119
        %2504 = vst [vmem:[%s135 + $0x1f0] sm:$0xff] %v2120
        %2505 = vst [vmem:[%s135 + $0x1f8] sm:$0xff] %v2121
        %2506 = vst [vmem:[%s135 + $0x200] sm:$0xff] %v2122
        %2507 = vst [vmem:[%s135 + $0x208] sm:$0xff] %v2123
        %2508 = vst [vmem:[%s135 + $0x210] sm:$0xff] %v2124
        %2509 = vst [vmem:[%s135 + $0x218] sm:$0xff] %v2125
        %2510 = vst [vmem:[%s135 + $0x220] sm:$0xff] %v2126
        %2511 = vst [vmem:[%s135 + $0x228] sm:$0xff] %v2127
        %2512 = vst [vmem:[%s135 + $0x230] sm:$0xff] %v2128
        %2513 = vst [vmem:[%s135 + $0x238] sm:$0xff] %v2129
        %2514 = vst [vmem:[%s135 + $0x240] sm:$0xff] %v2130
        %2515 = vst [vmem:[%s135 + $0x248] sm:$0xff] %v2131
        %2516 = vst [vmem:[%s135 + $0x250] sm:$0xff] %v2132
        %2517 = vst [vmem:[%s135 + $0x258] sm:$0xff] %v2133
        %2518 = vst [vmem:[%s135 + $0x260] sm:$0xff] %v2134
        %2519 = vst [vmem:[%s135 + $0x268] sm:$0xff] %v2135
        %2520 = vst [vmem:[%s135 + $0x270] sm:$0xff] %v2136
        %2521 = vst [vmem:[%s135 + $0x278] sm:$0xff] %v2137
        %2522 = vst [vmem:[%s135 + $0x280] sm:$0xff] %v2138
        %2523 = vst [vmem:[%s135 + $0x288] sm:$0xff] %v2139
        %2524 = vst [vmem:[%s135 + $0x290] sm:$0xff] %v2140
        %2525 = vst [vmem:[%s135 + $0x298] sm:$0xff] %v2141
        %2526 = vst [vmem:[%s135 + $0x2a0] sm:$0xff] %v2142
        %2527 = vst [vmem:[%s135 + $0x2a8] sm:$0xff] %v2143
        %2528 = vst [vmem:[%s135 + $0x2b0] sm:$0xff] %v2144
        %2529 = vst [vmem:[%s135 + $0x2b8] sm:$0xff] %v2145
        %2530 = vst [vmem:[%s135 + $0x2c0] sm:$0xff] %v2146
        %2531 = vst [vmem:[%s135 + $0x2c8] sm:$0xff] %v2147
        %2532 = vst [vmem:[%s135 + $0x2d0] sm:$0xff] %v2148
        %2533 = vst [vmem:[%s135 + $0x2d8] sm:$0xff] %v2149
        %2534 = vst [vmem:[%s135 + $0x2e0] sm:$0xff] %v2150
        %2535 = vst [vmem:[%s135 + $0x2e8] sm:$0xff] %v2151
        %2536 = vst [vmem:[%s135 + $0x2f0] sm:$0xff] %v2152
        %2537 = vst [vmem:[%s135 + $0x2f8] sm:$0xff] %v2153
        %2538 = vst [vmem:[%s135 + $0x300] sm:$0xff] %v2154
        %2539 = vst [vmem:[%s135 + $0x308] sm:$0xff] %v2155
        %2540 = vst [vmem:[%s135 + $0x310] sm:$0xff] %v2156
        %2541 = vst [vmem:[%s135 + $0x318] sm:$0xff] %v2157
        %2542 = vst [vmem:[%s135 + $0x320] sm:$0xff] %v2158
        %2543 = vst [vmem:[%s135 + $0x328] sm:$0xff] %v2159
        %2544 = vst [vmem:[%s135 + $0x330] sm:$0xff] %v2160
        %2545 = vst [vmem:[%s135 + $0x338] sm:$0xff] %v2161
        %2546 = vst [vmem:[%s135 + $0x340] sm:$0xff] %v2162
        %2547 = vst [vmem:[%s135 + $0x348] sm:$0xff] %v2163
        %2548 = vst [vmem:[%s135 + $0x350] sm:$0xff] %v2164
        %2549 = vst [vmem:[%s135 + $0x358] sm:$0xff] %v2165
        %2550 = vst [vmem:[%s135 + $0x360] sm:$0xff] %v2166
        %2551 = vst [vmem:[%s135 + $0x368] sm:$0xff] %v2167
        %2552 = vst [vmem:[%s135 + $0x370] sm:$0xff] %v2168
        %2553 = vst [vmem:[%s135 + $0x378] sm:$0xff] %v2169
        %2554 = vst [vmem:[%s135 + $0x380] sm:$0xff] %v2170
        %2555 = vst [vmem:[%s135 + $0x388] sm:$0xff] %v2171
        %2556 = vst [vmem:[%s135 + $0x390] sm:$0xff] %v2172
        %2557 = vst [vmem:[%s135 + $0x398] sm:$0xff] %v2173
        %2558 = vst [vmem:[%s135 + $0x3a0] sm:$0xff] %v2174
        %2559 = vst [vmem:[%s135 + $0x3a8] sm:$0xff] %v2175
        %2560 = vst [vmem:[%s135 + $0x3b0] sm:$0xff] %v2176
        %2561 = vst [vmem:[%s135 + $0x3b8] sm:$0xff] %v2177
        %2562 = vst [vmem:[%s135 + $0x3c0] sm:$0xff] %v2178
        %2563 = vst [vmem:[%s135 + $0x3c8] sm:$0xff] %v2179
        %2564 = vst [vmem:[%s135 + $0x3d0] sm:$0xff] %v2180
        %2565 = vst [vmem:[%s135 + $0x3d8] sm:$0xff] %v2181
        %2566 = vst [vmem:[%s135 + $0x3e0] sm:$0xff] %v2182
        %2567 = vst [vmem:[%s135 + $0x3e8] sm:$0xff] %v2183
        %2568 = vst [vmem:[%s135 + $0x3f0] sm:$0xff] %v2184
        %2569 = vst [vmem:[%s135 + $0x3f8] sm:$0xff] %v2185
        %2570 = vst [vmem:[%s135 + $0x400] sm:$0xff] %v2186
        %2571 = vst [vmem:[%s135 + $0x408] sm:$0xff] %v2187
        %2572 = vst [vmem:[%s135 + $0x410] sm:$0xff] %v2188
        %2573 = vst [vmem:[%s135 + $0x418] sm:$0xff] %v2189
        %2574 = vst [vmem:[%s135 + $0x420] sm:$0xff] %v2190
        %2575 = vst [vmem:[%s135 + $0x428] sm:$0xff] %v2191
        %2576 = vst [vmem:[%s135 + $0x430] sm:$0xff] %v2192
        %2577 = vst [vmem:[%s135 + $0x438] sm:$0xff] %v2193
        %2578 = vst [vmem:[%s135 + $0x440] sm:$0xff] %v2194
        %2579 = vst [vmem:[%s135 + $0x448] sm:$0xff] %v2195
        %2580 = vst [vmem:[%s135 + $0x450] sm:$0xff] %v2196
        %2581 = vst [vmem:[%s135 + $0x458] sm:$0xff] %v2197
        %2582 = vst [vmem:[%s135 + $0x460] sm:$0xff] %v2198
        %2583 = vst [vmem:[%s135 + $0x468] sm:$0xff] %v2199
        %2584 = vst [vmem:[%s135 + $0x470] sm:$0xff] %v2200
        %2585 = vst [vmem:[%s135 + $0x478] sm:$0xff] %v2201
        %2586 = vst [vmem:[%s135 + $0x480] sm:$0xff] %v2202
        %2587 = vst [vmem:[%s135 + $0x488] sm:$0xff] %v2203
        %2588 = vst [vmem:[%s135 + $0x490] sm:$0xff] %v2204
        %2589 = vst [vmem:[%s135 + $0x498] sm:$0xff] %v2205
        %2590 = vst [vmem:[%s135 + $0x4a0] sm:$0xff] %v2206
        %2591 = vst [vmem:[%s135 + $0x4a8] sm:$0xff] %v2207
        %2592 = vst [vmem:[%s135 + $0x4b0] sm:$0xff] %v2208
        %2593 = vst [vmem:[%s135 + $0x4b8] sm:$0xff] %v2209
        %2594 = vst [vmem:[%s135 + $0x4c0] sm:$0xff] %v2210
        %2595 = vst [vmem:[%s135 + $0x4c8] sm:$0xff] %v2211
        %2596 = vst [vmem:[%s135 + $0x4d0] sm:$0xff] %v2212
        %2597 = vst [vmem:[%s135 + $0x4d8] sm:$0xff] %v2213
        %2598 = vst [vmem:[%s135 + $0x4e0] sm:$0xff] %v2214
        %2599 = vst [vmem:[%s135 + $0x4e8] sm:$0xff] %v2215
        %2600 = vst [vmem:[%s135 + $0x4f0] sm:$0xff] %v2216
        %2601 = vst [vmem:[%s135 + $0x4f8] sm:$0xff] %v2217
        %2602 = vst [vmem:[%s135 + $0x500] sm:$0xff] %v2218
        %2603 = vst [vmem:[%s135 + $0x508] sm:$0xff] %v2219
        %2604 = vst [vmem:[%s135 + $0x510] sm:$0xff] %v2220
        %2605 = vst [vmem:[%s135 + $0x518] sm:$0xff] %v2221
        %2606 = vst [vmem:[%s135 + $0x520] sm:$0xff] %v2222
        %2607 = vst [vmem:[%s135 + $0x528] sm:$0xff] %v2223
        %2608 = vst [vmem:[%s135 + $0x530] sm:$0xff] %v2224
        %2609 = vst [vmem:[%s135 + $0x538] sm:$0xff] %v2225
        %2610 = vst [vmem:[%s135 + $0x540] sm:$0xff] %v2226
        %2611 = vst [vmem:[%s135 + $0x548] sm:$0xff] %v2227
        %2612 = vst [vmem:[%s135 + $0x550] sm:$0xff] %v2228
        %2613 = vst [vmem:[%s135 + $0x558] sm:$0xff] %v2229
        %2614 = vst [vmem:[%s135 + $0x560] sm:$0xff] %v2230
        %2615 = vst [vmem:[%s135 + $0x568] sm:$0xff] %v2231
        %2616 = vst [vmem:[%s135 + $0x570] sm:$0xff] %v2232
        %2617 = vst [vmem:[%s135 + $0x578] sm:$0xff] %v2233
        %2618 = vst [vmem:[%s135 + $0x580] sm:$0xff] %v2234
        %2619 = vst [vmem:[%s135 + $0x588] sm:$0xff] %v2235
        %2620 = vst [vmem:[%s135 + $0x590] sm:$0xff] %v2236
        %2621 = vst [vmem:[%s135 + $0x598] sm:$0xff] %v2237
        %2622 = vst [vmem:[%s135 + $0x5a0] sm:$0xff] %v2238
        %2623 = vst [vmem:[%s135 + $0x5a8] sm:$0xff] %v2239
        %2624 = vst [vmem:[%s135 + $0x5b0] sm:$0xff] %v2240
        %2625 = vst [vmem:[%s135 + $0x5b8] sm:$0xff] %v2241
        %2626 = vst [vmem:[%s135 + $0x5c0] sm:$0xff] %v2242
        %2627 = vst [vmem:[%s135 + $0x5c8] sm:$0xff] %v2243
        %2628 = vst [vmem:[%s135 + $0x5d0] sm:$0xff] %v2244
        %2629 = vst [vmem:[%s135 + $0x5d8] sm:$0xff] %v2245
        %2630 = vst [vmem:[%s135 + $0x5e0] sm:$0xff] %v2246
        %2631 = vst [vmem:[%s135 + $0x5e8] sm:$0xff] %v2247
        %2632 = vst [vmem:[%s135 + $0x5f0] sm:$0xff] %v2248
        %2633 = vst [vmem:[%s135 + $0x5f8] sm:$0xff] %v2249
        %2634 = vst [vmem:[%s135 + $0x600] sm:$0xff] %v2250
        %2635 = vst [vmem:[%s135 + $0x608] sm:$0xff] %v2251
        %2636 = vst [vmem:[%s135 + $0x610] sm:$0xff] %v2252
        %2637 = vst [vmem:[%s135 + $0x618] sm:$0xff] %v2253
        %2638 = vst [vmem:[%s135 + $0x620] sm:$0xff] %v2254
        %2639 = vst [vmem:[%s135 + $0x628] sm:$0xff] %v2255
        %2640 = vst [vmem:[%s135 + $0x630] sm:$0xff] %v2256
        %2641 = vst [vmem:[%s135 + $0x638] sm:$0xff] %v2257
        %2642 = vst [vmem:[%s135 + $0x640] sm:$0xff] %v2258
        %2643 = vst [vmem:[%s135 + $0x648] sm:$0xff] %v2259
        %2644 = vst [vmem:[%s135 + $0x650] sm:$0xff] %v2260
        %2645 = vst [vmem:[%s135 + $0x658] sm:$0xff] %v2261
        %2646 = vst [vmem:[%s135 + $0x660] sm:$0xff] %v2262
        %2647 = vst [vmem:[%s135 + $0x668] sm:$0xff] %v2263
        %2648 = vst [vmem:[%s135 + $0x670] sm:$0xff] %v2264
        %2649 = vst [vmem:[%s135 + $0x678] sm:$0xff] %v2265
        %2650 = vst [vmem:[%s135 + $0x680] sm:$0xff] %v2266
        %2651 = vst [vmem:[%s135 + $0x688] sm:$0xff] %v2267
        %2652 = vst [vmem:[%s135 + $0x690] sm:$0xff] %v2268
        %2653 = vst [vmem:[%s135 + $0x698] sm:$0xff] %v2269
        %2654 = vst [vmem:[%s135 + $0x6a0] sm:$0xff] %v2270
        %2655 = vst [vmem:[%s135 + $0x6a8] sm:$0xff] %v2271
        %2656 = vst [vmem:[%s135 + $0x6b0] sm:$0xff] %v2272
        %2657 = vst [vmem:[%s135 + $0x6b8] sm:$0xff] %v2273
        %2658 = vst [vmem:[%s135 + $0x6c0] sm:$0xff] %v2274
        %2659 = vst [vmem:[%s135 + $0x6c8] sm:$0xff] %v2275
        %2660 = vst [vmem:[%s135 + $0x6d0] sm:$0xff] %v2276
        %2661 = vst [vmem:[%s135 + $0x6d8] sm:$0xff] %v2277
        %2662 = vst [vmem:[%s135 + $0x6e0] sm:$0xff] %v2278
        %2663 = vst [vmem:[%s135 + $0x6e8] sm:$0xff] %v2279
        %2664 = vst [vmem:[%s135 + $0x6f0] sm:$0xff] %v2280
        %2665 = vst [vmem:[%s135 + $0x6f8] sm:$0xff] %v2281
        %2666 = vst [vmem:[%s135 + $0x700] sm:$0xff] %v2282
        %2667 = vst [vmem:[%s135 + $0x708] sm:$0xff] %v2283
        %2668 = vst [vmem:[%s135 + $0x710] sm:$0xff] %v2284
        %2669 = vst [vmem:[%s135 + $0x718] sm:$0xff] %v2285
        %2670 = vst [vmem:[%s135 + $0x720] sm:$0xff] %v2286
        %2671 = vst [vmem:[%s135 + $0x728] sm:$0xff] %v2287
        %2672 = vst [vmem:[%s135 + $0x730] sm:$0xff] %v2288
        %2673 = vst [vmem:[%s135 + $0x738] sm:$0xff] %v2289
        %2674 = vst [vmem:[%s135 + $0x740] sm:$0xff] %v2290
        %2675 = vst [vmem:[%s135 + $0x748] sm:$0xff] %v2291
        %2676 = vst [vmem:[%s135 + $0x750] sm:$0xff] %v2292
        %2677 = vst [vmem:[%s135 + $0x758] sm:$0xff] %v2293
        %2678 = vst [vmem:[%s135 + $0x760] sm:$0xff] %v2294
        %2679 = vst [vmem:[%s135 + $0x768] sm:$0xff] %v2295
        %2680 = vst [vmem:[%s135 + $0x770] sm:$0xff] %v2296
        %2681 = vst [vmem:[%s135 + $0x778] sm:$0xff] %v2297
        %2682 = vst [vmem:[%s135 + $0x780] sm:$0xff] %v2298
        %2683 = vst [vmem:[%s135 + $0x788] sm:$0xff] %v2299
        %2684 = vst [vmem:[%s135 + $0x790] sm:$0xff] %v2300
        %2685 = vst [vmem:[%s135 + $0x798] sm:$0xff] %v2301
        %2686 = vst [vmem:[%s135 + $0x7a0] sm:$0xff] %v2302
        %2687 = vst [vmem:[%s135 + $0x7a8] sm:$0xff] %v2303
        %2688 = vst [vmem:[%s135 + $0x7b0] sm:$0xff] %v2304
        %2689 = vst [vmem:[%s135 + $0x7b8] sm:$0xff] %v2305
        %2690 = vst [vmem:[%s135 + $0x7c0] sm:$0xff] %v2306
        %2691 = vst [vmem:[%s135 + $0x7c8] sm:$0xff] %v2307
        %2692 = vst [vmem:[%s135 + $0x7d0] sm:$0xff] %v2308
        %2693 = vst [vmem:[%s135 + $0x7d8] sm:$0xff] %v2309
        %2694 = vst [vmem:[%s135 + $0x7e0] sm:$0xff] %v2310
        %2695 = vst [vmem:[%s135 + $0x7e8] sm:$0xff] %v2311
        %2696 = vst [vmem:[%s135 + $0x7f0] sm:$0xff] %v2312
        %2697 = vst [vmem:[%s135 + $0x7f8] sm:$0xff] %v2313
        %2698 = vst [vmem:[%s135 + $0x800] sm:$0xff] %v2314
        %2699 = vst [vmem:[%s135 + $0x808] sm:$0xff] %v2315
        %2700 = vst [vmem:[%s135 + $0x810] sm:$0xff] %v2316
        %2701 = vst [vmem:[%s135 + $0x818] sm:$0xff] %v2317
        %2702 = vst [vmem:[%s135 + $0x820] sm:$0xff] %v2318
        %2703 = vst [vmem:[%s135 + $0x828] sm:$0xff] %v2319
        %2704 = vst [vmem:[%s135 + $0x830] sm:$0xff] %v2320
        %2705 = vst [vmem:[%s135 + $0x838] sm:$0xff] %v2321
        %2706 = vst [vmem:[%s135 + $0x840] sm:$0xff] %v2322
        %2707 = vst [vmem:[%s135 + $0x848] sm:$0xff] %v2323
        %2708 = vst [vmem:[%s135 + $0x850] sm:$0xff] %v2324
        %2709 = vst [vmem:[%s135 + $0x858] sm:$0xff] %v2325
        %2710 = vst [vmem:[%s135 + $0x860] sm:$0xff] %v2326
        %2711 = vst [vmem:[%s135 + $0x868] sm:$0xff] %v2327
        %2712 = vst [vmem:[%s135 + $0x870] sm:$0xff] %v2328
        %2713 = vst [vmem:[%s135 + $0x878] sm:$0xff] %v2329
        %2714 = vst [vmem:[%s135 + $0x880] sm:$0xff] %v2330
        %2715 = vst [vmem:[%s135 + $0x888] sm:$0xff] %v2331
        %2716 = vst [vmem:[%s135 + $0x890] sm:$0xff] %v2332
        %2717 = vst [vmem:[%s135 + $0x898] sm:$0xff] %v2333
        %2718 = vst [vmem:[%s135 + $0x8a0] sm:$0xff] %v2334
        %2719 = vst [vmem:[%s135 + $0x8a8] sm:$0xff] %v2335
        %2720 = vst [vmem:[%s135 + $0x8b0] sm:$0xff] %v2336
        %2721 = vst [vmem:[%s135 + $0x8b8] sm:$0xff] %v2337
        %2722 = vst [vmem:[%s135 + $0x8c0] sm:$0xff] %v2338
        %2723 = vst [vmem:[%s135 + $0x8c8] sm:$0xff] %v2339
        %2724 = vst [vmem:[%s135 + $0x8d0] sm:$0xff] %v2340
        %2725 = vst [vmem:[%s135 + $0x8d8] sm:$0xff] %v2341
        %2726 = vst [vmem:[%s135 + $0x8e0] sm:$0xff] %v2342
        %2727 = vst [vmem:[%s135 + $0x8e8] sm:$0xff] %v2343
        %2728 = vst [vmem:[%s135 + $0x8f0] sm:$0xff] %v2344
        %2729 = vst [vmem:[%s135 + $0x8f8] sm:$0xff] %v2345
        %2730 = vst [vmem:[%s135 + $0x900] sm:$0xff] %v2346
        %2731 = vst [vmem:[%s135 + $0x908] sm:$0xff] %v2347
        %2732 = vst [vmem:[%s135 + $0x910] sm:$0xff] %v2348
        %2733 = vst [vmem:[%s135 + $0x918] sm:$0xff] %v2349
        %2734 = vst [vmem:[%s135 + $0x920] sm:$0xff] %v2350
        %2735 = vst [vmem:[%s135 + $0x928] sm:$0xff] %v2351
        %2736 = vst [vmem:[%s135 + $0x930] sm:$0xff] %v2352
        %2737 = vst [vmem:[%s135 + $0x938] sm:$0xff] %v2353
        %2738 = vst [vmem:[%s135 + $0x940] sm:$0xff] %v2354
        %2739 = vst [vmem:[%s135 + $0x948] sm:$0xff] %v2355
        %2740 = vst [vmem:[%s135 + $0x950] sm:$0xff] %v2356
        %2741 = vst [vmem:[%s135 + $0x958] sm:$0xff] %v2357
        %2742 = vst [vmem:[%s135 + $0x960] sm:$0xff] %v2358
        %2743 = vst [vmem:[%s135 + $0x968] sm:$0xff] %v2359
        %2744 = vst [vmem:[%s135 + $0x970] sm:$0xff] %v2360
        %2745 = vst [vmem:[%s135 + $0x978] sm:$0xff] %v2361
        %2746 = vst [vmem:[%s135 + $0x980] sm:$0xff] %v2362
        %2747 = vst [vmem:[%s135 + $0x988] sm:$0xff] %v2363
        %2748 = vst [vmem:[%s135 + $0x990] sm:$0xff] %v2364
        %2749 = vst [vmem:[%s135 + $0x998] sm:$0xff] %v2365
        %2750 = vst [vmem:[%s135 + $0x9a0] sm:$0xff] %v2366
        %2751 = vst [vmem:[%s135 + $0x9a8] sm:$0xff] %v2367
        %2752 = vst [vmem:[%s135 + $0x9b0] sm:$0xff] %v2368
        %2753 = vst [vmem:[%s135 + $0x9b8] sm:$0xff] %v2369
        %2754 = vst [vmem:[%s135 + $0x9c0] sm:$0xff] %v2370
        %2755 = vst [vmem:[%s135 + $0x9c8] sm:$0xff] %v2371
        %2756 = vst [vmem:[%s135 + $0x9d0] sm:$0xff] %v2372
        %2757 = vst [vmem:[%s135 + $0x9d8] sm:$0xff] %v2373
        %2758 = vst [vmem:[%s135 + $0x9e0] sm:$0xff] %v2374
        %2759 = vst [vmem:[%s135 + $0x9e8] sm:$0xff] %v2375
        %2760 = vst [vmem:[%s135 + $0x9f0] sm:$0xff] %v2376
        %2761 = vst [vmem:[%s135 + $0x9f8] sm:$0xff] %v2377
        %2762 = vst [vmem:[%s135 + $0xa00] sm:$0xff] %v2378
        %2763 = vst [vmem:[%s135 + $0xa08] sm:$0xff] %v2379
        %2764 = vst [vmem:[%s135 + $0xa10] sm:$0xff] %v2380
        %2765 = vst [vmem:[%s135 + $0xa18] sm:$0xff] %v2381
        %2766 = vst [vmem:[%s135 + $0xa20] sm:$0xff] %v2382
        %2767 = vst [vmem:[%s135 + $0xa28] sm:$0xff] %v2383
        %2768 = vst [vmem:[%s135 + $0xa30] sm:$0xff] %v2384
        %2769 = vst [vmem:[%s135 + $0xa38] sm:$0xff] %v2385
        %2770 = vst [vmem:[%s135 + $0xa40] sm:$0xff] %v2386
        %2771 = vst [vmem:[%s135 + $0xa48] sm:$0xff] %v2387
        %2772 = vst [vmem:[%s135 + $0xa50] sm:$0xff] %v2388
        %2773 = vst [vmem:[%s135 + $0xa58] sm:$0xff] %v2389
        %2774 = vst [vmem:[%s135 + $0xa60] sm:$0xff] %v2390
        %2775 = vst [vmem:[%s135 + $0xa68] sm:$0xff] %v2391
        %2776 = vst [vmem:[%s135 + $0xa70] sm:$0xff] %v2392
        %2777 = vst [vmem:[%s135 + $0xa78] sm:$0xff] %v2393
        %2778 = vst [vmem:[%s135 + $0xa80] sm:$0xff] %v2394
        %2779 = vst [vmem:[%s135 + $0xa88] sm:$0xff] %v2395
        %2780 = vst [vmem:[%s135 + $0xa90] sm:$0xff] %v2396
        %2781 = vst [vmem:[%s135 + $0xa98] sm:$0xff] %v2397
        %2782 = vst [vmem:[%s135 + $0xaa0] sm:$0xff] %v2398
        %2783 = vst [vmem:[%s135 + $0xaa8] sm:$0xff] %v2399
        %2784 = vst [vmem:[%s135 + $0xab0] sm:$0xff] %v2400
        %2785 = vst [vmem:[%s135 + $0xab8] sm:$0xff] %v2401
        %2786 = vst [vmem:[%s135 + $0xac0] sm:$0xff] %v2402
        %2787 = vst [vmem:[%s135 + $0xac8] sm:$0xff] %v2403
        %2788 = vst [vmem:[%s135 + $0xad0] sm:$0xff] %v2404
        %2789 = vst [vmem:[%s135 + $0xad8] sm:$0xff] %v2405
        %2790 = vst [vmem:[%s135 + $0xae0] sm:$0xff] %v2406
        %2791 = vst [vmem:[%s135 + $0xae8] sm:$0xff] %v2407
        %2792 = vst [vmem:[%s135 + $0xaf0] sm:$0xff] %v2408
        %2793 = vst [vmem:[%s135 + $0xaf8] sm:$0xff] %v2409
        %2794 = vst [vmem:[%s135 + $0xb00] sm:$0xff] %v2410
        %2795 = vst [vmem:[%s135 + $0xb08] sm:$0xff] %v2411
        %2796 = vst [vmem:[%s135 + $0xb10] sm:$0xff] %v2412
        %2797 = vst [vmem:[%s135 + $0xb18] sm:$0xff] %v2413
        %2798 = vst [vmem:[%s135 + $0xb20] sm:$0xff] %v2414
        %2799 = vst [vmem:[%s135 + $0xb28] sm:$0xff] %v2415
        %2800 = vst [vmem:[%s135 + $0xb30] sm:$0xff] %v2416
        %2801 = vst [vmem:[%s135 + $0xb38] sm:$0xff] %v2417
        %2802 = vst [vmem:[%s135 + $0xb40] sm:$0xff] %v2418
        %2803 = vst [vmem:[%s135 + $0xb48] sm:$0xff] %v2419
        %2804 = vst [vmem:[%s135 + $0xb50] sm:$0xff] %v2420
        %2805 = vst [vmem:[%s135 + $0xb58] sm:$0xff] %v2421
        %2806 = vst [vmem:[%s135 + $0xb60] sm:$0xff] %v2422
        %2807 = vst [vmem:[%s135 + $0xb68] sm:$0xff] %v2423
        %2808 = vst [vmem:[%s135 + $0xb70] sm:$0xff] %v2424
        %2809 = vst [vmem:[%s135 + $0xb78] sm:$0xff] %v2425
        %2810 = vst [vmem:[%s135 + $0xb80] sm:$0xff] %v2426
        %2811 = vst [vmem:[%s135 + $0xb88] sm:$0xff] %v2427
        %2812 = vst [vmem:[%s135 + $0xb90] sm:$0xff] %v2428
        %2813 = vst [vmem:[%s135 + $0xb98] sm:$0xff] %v2429
        %2814 = vst [vmem:[%s135 + $0xba0] sm:$0xff] %v2430
        %2815 = vst [vmem:[%s135 + $0xba8] sm:$0xff] %v2431
        %2816 = vst [vmem:[%s135 + $0xbb0] sm:$0xff] %v2432
        %2817 = vst [vmem:[%s135 + $0xbb8] sm:$0xff] %v2433
        %2818 = vst [vmem:[%s135 + $0xbc0] sm:$0xff] %v2434
        %2819 = vst [vmem:[%s135 + $0xbc8] sm:$0xff] %v2435
        %2820 = vst [vmem:[%s135 + $0xbd0] sm:$0xff] %v2436
        %2821 = vst [vmem:[%s135 + $0xbd8] sm:$0xff] %v2437
        %2822 = vst [vmem:[%s135 + $0xbe0] sm:$0xff] %v2438
        %2823 = vst [vmem:[%s135 + $0xbe8] sm:$0xff] %v2439
        %2824 = vst [vmem:[%s135 + $0xbf0] sm:$0xff] %v2440
        %2825 = vst [vmem:[%s135 + $0xbf8] sm:$0xff] %v2441
        %s2826 = sand.u32 %s52, 1
        %s2827 = scalar_lea.sflag [#allocation4], %s2826
        %s2828 = sand.u32 %s52, 1
        %s2829 = smul.addr %s2828, 3072
        %s2830 = scalar_lea.vmem [#allocation5], %s2829
        // Predicated region
        $region29: #{tpu_custom_call.1} parent=23 // pred_check
          %p2831 = pneg %p62
        $region30: #{tpu_custom_call.1} parent=23 // pred_check_branch
          %2833 = sbr.rel (%p2831) target = $region32
        $region31: #{tpu_custom_call.1} parent=23 // pred_region
          %s2834 = smul.u32 16, %s18
          %s2836 = ssub.s32 49152, 49152
          %2837 = vsyncadd %s2827, %s2836
          %s2838 = smul.addr %s2834, 24
          %s2839 = smul.addr %s2838, 128
          %s2840 = scalar_lea.hbm %s1, %s2839
          %s2841 = sshll.u32 %s2830, 4
          %s2842 = int_to_ptr.vmem [resolvable:$true] %s2841
          %2847 = dma.vmem_to_hbm [thread:$0]  %s2842, 49152, %s2840, %s2827, 3072, 3072, 192
        $region32: #{tpu_custom_call.1} parent=23 // pred_fallthru
          _
      $region24: #{tpu_custom_call.1} parent=5 // pred_fallthru
        _
      %p2848 = scmp.le.s32.totalorder 2, %s13
      // Predicated region
      $region33: #{tpu_custom_call.1} parent=5 // pred_check
        %p2849 = pneg %p2848
      $region34: #{tpu_custom_call.1} parent=5 // pred_check_branch
        %2851 = sbr.rel (%p2849) target = $region36
      $region35: #{tpu_custom_call.1} parent=5 // pred_region
        %s2852 = ssub.s32 %s13, 2
        // Predicated region
        $region37: #{tpu_custom_call.1} parent=35 // pred_check
          %p2853 = pneg %p68
        $region38: #{tpu_custom_call.1} parent=35 // pred_check_branch
          %2855 = sbr.rel (%p2853) target = $region40
        $region39: #{tpu_custom_call.1} parent=35 // pred_region
          %s2856 = sand.u32 %s53, 1
          %s2857 = scalar_lea.sflag [#allocation4], %s2856
          %s2858 = sand.u32 %s53, 1
          %s2859 = smul.addr %s2858, 3072
          %s2860 = scalar_lea.vmem [#allocation5], %s2859
          %2861 = dma.done %s2857, 49152
        $region40: #{tpu_custom_call.1} parent=35 // pred_fallthru
          _
      $region36: #{tpu_custom_call.1} parent=5 // pred_fallthru
        _
    $region6: #{tpu_custom_call.1} parent=1 // loop_footer
      %s17 = sadd.s32 1, %s13
    $region7: #{tpu_custom_call.1} parent=1 // loop_footer_branch
      %12 = sbr.rel target = $region3
    $region8: #{tpu_custom_call.1} parent=1 // loop_exit
      _
    %2862 = vsyncpa [#allocation3], 1
    %s2863 = scalar_lea.sflag [#allocation3], 1
    %2864 = vsyncpa %s2863, 1
    %2865 = vsyncpa [#allocation4], 1
    %s2866 = scalar_lea.sflag [#allocation4], 1
    %2867 = vsyncpa %s2866, 1

</llo_original>
